<compile_context>
chip_gen: v7x
topology: tpu7x:2x2x1
jax: 0.10.0
libtpu: 0.0.40
codegen_flags: <defaults>
</compile_context>

<pallas_src>
import jax
import jax.numpy as jnp
from jax.experimental import pallas as pl
from jax.experimental.pallas import tpu as pltpu

DIM = 3        # xyz
HIDDEN = 32    # hidden size of encoder & decoder
C_DIM = 32     # conditioning code size
Z_DIM = 0      # p0_z = Normal([], []) -> z is (B, 0) and contributes nothing


def _round_up(x, m):
    return ((x + m - 1) // m) * m


# --------------------------------------------------------------------------------------
# Encoder kernel: SimplePointnet + (folded-in) decoder fc_c.  Grid: (B,).
# Inputs block (1, N, DIM); output: per-batch conditioning row (1, 1, H).
# --------------------------------------------------------------------------------------
def encoder_kernel(inp_ref,
                   e_wpos, e_bpos, e_w0, e_b0, e_wtop, e_wbot, e_bstk,
                   e_wc, e_bc, d_wc, d_bc,
                   cond_ref):
    f32 = jnp.float32
    x = inp_ref[0]                                                      # (N, 3)

    # fc_pos (3 -> 2H): depth-3 contraction done as 3 VPU FMAs (keeps the MXU slot free).
    net = (x[:, 0:1] * e_wpos[0:1, :]
           + x[:, 1:2] * e_wpos[1:2, :]
           + x[:, 2:3] * e_wpos[2:3, :]
           + e_bpos[...])                                               # (N, 2H)

    # fc_0 (2H -> H)
    net = jnp.dot(jnp.maximum(net, 0.0), e_w0[...],
                  preferred_element_type=f32) + e_b0[...]               # (N, H)

    # fc_1..fc_3: cat([net, pooled]) @ W  ==  net @ W_top + pooled @ W_bot (rank-1 update).
    # NOTE: the axis-0 max-pool is only valid because the full N point cloud is resident here.
    for i in range(3):
        pooled = jnp.max(net, axis=0, keepdims=True)                    # (1, H), pre-activation
        h = jnp.maximum(net, 0.0)                                       # (N, H)
        hp = jnp.maximum(pooled, 0.0)                                   # (1, H)
        net = (jnp.dot(h, e_wtop[i], preferred_element_type=f32)
               + jnp.dot(hp, e_wbot[i], preferred_element_type=f32)
               + e_bstk[i])                                             # (N, H)

    net = jnp.max(net, axis=0, keepdims=True)                           # (1, H) global pool
    c = jnp.dot(jnp.maximum(net, 0.0), e_wc[...],
                preferred_element_type=f32) + e_bc[...]                 # (1, C_DIM)

    # z ~ p0_z: default prior is 0-dimensional -> z = (B, 0), no decoder contribution.

    # Decoder's fc_c is per-batch only, so it is hoisted here (zero redundant work per T-tile).
    cond = jnp.dot(c, d_wc[...], preferred_element_type=f32) + d_bc[...]  # (1, H)
    cond_ref[0] = cond


# --------------------------------------------------------------------------------------
# Decoder kernel: ONet Decoder in transposed (H, T_TILE) layout.  Grid: (B, T/T_TILE).
# p is fed transposed as (B, 3, T) blocks (1, 3, T_TILE) so points sit on the lane axis.
# Output logits block is lane-dense (1, 1, T_TILE).
# --------------------------------------------------------------------------------------
def decoder_kernel(pt_ref, cond_ref,
                   d_wpT, d_bpC, blk_w0T, blk_b0C, blk_w1T, blk_b1C,
                   d_woutC, d_boutC,
                   out_ref):
    f32 = jnp.float32
    xs = pt_ref[0]                                                      # (3, T_TILE)
    cond = cond_ref[0]                                                  # (H, 1) conditioning col

    # fc_p (3 -> H) as 3 VPU FMAs; activations are (H, T_TILE), lane-dense.
    net = (d_wpT[:, 0:1] * xs[0:1, :]
           + d_wpT[:, 1:2] * xs[1:2, :]
           + d_wpT[:, 2:3] * xs[2:3, :]
           + d_bpC[...])                                                # (H, T_TILE)
    net = net + cond                                                    # fc_c conditioning

    # 5 x ResnetBlockFC: dx = W1^T @ relu(W0^T @ relu(net) + b0) + b1 ; net += dx
    for i in range(5):
        h = jnp.maximum(net, 0.0)
        dx = jnp.dot(blk_w0T[i], h, preferred_element_type=f32) + blk_b0C[i]
        dx = jnp.maximum(dx, 0.0)
        dx = jnp.dot(blk_w1T[i], dx, preferred_element_type=f32) + blk_b1C[i]
        net = net + dx                                                  # identity shortcut

    # fc_out (H -> 1) on the VPU + sublane reduce; result is already (1, T_TILE) lane-dense.
    h = jnp.maximum(net, 0.0)
    out_ref[0] = jnp.sum(h * d_woutC[...], axis=0, keepdims=True) + d_boutC[...]


# --------------------------------------------------------------------------------------
# Wrapper: forward(p, inputs) -> (logits, probs) of the Bernoulli p_r.
# --------------------------------------------------------------------------------------
def occupancy_network_forward(p, inputs, params, *, t_tile=512):
    B, T, _ = p.shape
    N = inputs.shape[1]
    H, C = HIDDEN, C_DIM

    def resident(a):
        nd = a.ndim
        return pl.BlockSpec(a.shape, lambda *_gi, _nd=nd: (0,) * _nd)

    cparams = dict(vmem_limit_bytes=32 * 1024 * 1024)

    # ----------------------- encoder pass (grid over batch) -----------------------
    e_w0, e_b0 = params["e_wstk"][0], params["e_bstk"][0]               # fc_0 full weight
    e_wtop = params["e_wstk"][1:, :H, :]                                # (3, H, H): net half
    e_wbot = params["e_wstk"][1:, H:, :]                                # (3, H, H): pooled half
    e_bstk = params["e_bstk"][1:]                                       # (3, 1, H)
    enc_w = [params["e_wpos"], params["e_bpos"], e_w0, e_b0,
             e_wtop, e_wbot, e_bstk,
             params["e_wc"], params["e_bc"],
             params["d_wc"], params["d_bc"]]

    cond_rows = pl.pallas_call(
        encoder_kernel,
        out_shape=jax.ShapeDtypeStruct((B, 1, H), jnp.float32),
        grid_spec=pltpu.PrefetchScalarGridSpec(
            num_scalar_prefetch=0,
            grid=(B,),
            in_specs=[pl.BlockSpec((1, N, DIM), lambda b: (b, 0, 0))]
                     + [resident(w) for w in enc_w],
            out_specs=pl.BlockSpec((1, 1, H), lambda b: (b, 0, 0)),
        ),
        compiler_params=pltpu.CompilerParams(
            dimension_semantics=("parallel",), **cparams),
    )(inputs, *enc_w)

    cond_col = jnp.swapaxes(cond_rows, 1, 2)                            # (B, H, 1)

    # ----------------------- decoder pass (grid over batch x T tiles) -----------------------
    # Pre-transpose decoder weights once (layout plumbing, done outside the kernel).
    d_wpT = params["d_wp"].T                                            # (H, 3)
    d_bpC = params["d_bp"].T                                            # (H, 1)
    blk_w0T = jnp.swapaxes(params["blk_w0"], 1, 2)                      # (5, H, H)
    blk_b0C = jnp.swapaxes(params["blk_b0"], 1, 2)                      # (5, H, 1)
    blk_w1T = jnp.swapaxes(params["blk_w1"], 1, 2)
    blk_b1C = jnp.swapaxes(params["blk_b1"], 1, 2)
    dec_w = [d_wpT, d_bpC, blk_w0T, blk_b0C, blk_w1T, blk_b1C,
             params["d_wout"], params["d_bout"]]                        # (H,1), (1,1)

    # Lane-dense point layout: (B, 3, T), padded so T is a multiple of the tile.
    tt = max(128, min(t_tile, _round_up(T, 128)))
    Tp = _round_up(T, tt)
    pt = jnp.swapaxes(p, 1, 2)                                          # (B, 3, T)
    if Tp != T:
        pt = jnp.pad(pt, ((0, 0), (0, 0), (0, Tp - T)))
    nt = Tp // tt

    logits3 = pl.pallas_call(
        decoder_kernel,
        out_shape=jax.ShapeDtypeStruct((B, 1, Tp), jnp.float32),
        grid_spec=pltpu.PrefetchScalarGridSpec(
            num_scalar_prefetch=0,
            grid=(B, nt),
            in_specs=[pl.BlockSpec((1, DIM, tt), lambda b, t: (b, 0, t)),
                      pl.BlockSpec((1, H, 1), lambda b, t: (b, 0, 0))]
                     + [resident(w) for w in dec_w],
            out_specs=pl.BlockSpec((1, 1, tt), lambda b, t: (b, 0, t)),
        ),
        compiler_params=pltpu.CompilerParams(
            dimension_semantics=("parallel", "parallel"), **cparams),
    )(pt, cond_col, *dec_w)

    logits = logits3[:, 0, :T]                                          # (B, T), torch squeeze(-1)
    probs = jax.nn.sigmoid(logits)                                      # p_r = Bernoulli(logits)
    return logits, probs


# --------------------------------------------------------------------------------------
# Parameter init (PyTorch-Linear-style U(-1/sqrt(fan_in), 1/sqrt(fan_in))) and a pure-JAX
# reference for correctness checking.
# --------------------------------------------------------------------------------------
def init_params(key):
    def lin(k, n_in, n_out):
        k1, k2 = jax.random.split(k)
        s = 1.0 / float(n_in) ** 0.5
        w = jax.random.uniform(k1, (n_in, n_out), jnp.float32, -s, s)
        b = jax.random.uniform(k2, (1, n_out), jnp.float32, -s, s)
        return w, b

    keys = jax.random.split(key, 32)
    ki = iter(keys)
    H, C = HIDDEN, C_DIM
    params = {}

    # encoder (SimplePointnet)
    params["e_wpos"], params["e_bpos"] = lin(next(ki), DIM, 2 * H)
    ws, bs = zip(*[lin(next(ki), 2 * H, H) for _ in range(4)])          # fc_0..fc_3
    params["e_wstk"] = jnp.stack(ws)                                    # (4, 2H, H)
    params["e_bstk"] = jnp.stack(bs)                                    # (4, 1, H)
    params["e_wc"], params["e_bc"] = lin(next(ki), H, C)

    # decoder (ONet Decoder, z_dim = 0 so there is no fc_z)
    params["d_wp"], params["d_bp"] = lin(next(ki), DIM, H)
    params["d_wc"], params["d_bc"] = lin(next(ki), C, H)
    w0, b0, w1, b1 = [], [], [], []
    for _ in range(5):                                                  # 5 x ResnetBlockFC
        w, b = lin(next(ki), H, H); w0.append(w); b0.append(b)
        w, b = lin(next(ki), H, H); w1.append(w); b1.append(b)
    params["blk_w0"] = jnp.stack(w0)
    params["blk_b0"] = jnp.stack(b0)
    params["blk_w1"] = jnp.stack(w1)
    params["blk_b1"] = jnp.stack(b1)
    params["d_wout"], params["d_bout"] = lin(next(ki), H, 1)
    return params


def reference_forward(p, inputs, params):
    """Pure-JAX reference matching the PyTorch module (for validation only)."""
    def enc(x):                                                         # (N, 3) -> (1, C)
        net = x @ params["e_wpos"] + params["e_bpos"]
        net = jax.nn.relu(net) @ params["e_wstk"][0] + params["e_bstk"][0]
        for i in range(1, 4):
            pooled = jnp.max(net, axis=0, keepdims=True)
            net = jnp.concatenate([net, jnp.broadcast_to(pooled, net.shape)], axis=-1)
            net = jax.nn.relu(net) @ params["e_wstk"][i] + params["e_bstk"][i]
        net = jnp.max(net, axis=0, keepdims=True)
        return jax.nn.relu(net) @ params["e_wc"] + params["e_bc"]

    def dec(pts, c):                                                    # (T, 3), (1, C) -> (T,)
        net = pts @ params["d_wp"] + params["d_bp"]
        net = net + (c @ params["d_wc"] + params["d_bc"])
        for i in range(5):
            dx = jax.nn.relu(net) @ params["blk_w0"][i] + params["blk_b0"][i]
            dx = jax.nn.relu(dx) @ params["blk_w1"][i] + params["blk_b1"][i]
            net = net + dx
        return (jax.nn.relu(net) @ params["d_wout"] + params["d_bout"])[:, 0]

    return jnp.stack([dec(p[b], enc(inputs[b])) for b in range(p.shape[0])])


if __name__ == "__main__":
    key = jax.random.PRNGKey(0)
    kp, ki, kw = jax.random.split(key, 3)

    B, T, N = 2, 1024, 128                   # batch, query points, conditioning points
    p = jax.random.uniform(kp, (B, T, DIM), jnp.float32, -0.5, 0.5)        # sampled points
    inputs = jax.random.uniform(ki, (B, N, DIM), jnp.float32, -0.5, 0.5)   # conditioning cloud
    params = init_params(kw)

    logits, probs = occupancy_network_forward(p, inputs, params, t_tile=512)
    jax.block_until_ready((logits, probs))

    assert logits.shape == (B, T) and probs.shape == (B, T)
    assert bool(jnp.all(jnp.isfinite(logits))) and bool(jnp.all((probs >= 0) & (probs <= 1)))

    ref = reference_forward(p, inputs, params)
    max_err = float(jnp.max(jnp.abs(logits - ref)))
    assert max_err < 5e-2, f"kernel/reference mismatch: {max_err}"
    print("KERNEL_OK")
</pallas_src>

<mosaic_0001>
module attributes {stable_mosaic.version = 11 : i64} {
  func.func @encoder_kernel(%arg0: i32, %arg1: memref<1x128x3xf32, #tpu.memory_space<vmem>>, %arg2: memref<3x64xf32, #tpu.memory_space<vmem>>, %arg3: memref<1x64xf32, #tpu.memory_space<vmem>>, %arg4: memref<64x32xf32, #tpu.memory_space<vmem>>, %arg5: memref<1x32xf32, #tpu.memory_space<vmem>>, %arg6: memref<3x32x32xf32, #tpu.memory_space<vmem>>, %arg7: memref<3x32x32xf32, #tpu.memory_space<vmem>>, %arg8: memref<3x1x32xf32, #tpu.memory_space<vmem>>, %arg9: memref<32x32xf32, #tpu.memory_space<vmem>>, %arg10: memref<1x32xf32, #tpu.memory_space<vmem>>, %arg11: memref<32x32xf32, #tpu.memory_space<vmem>>, %arg12: memref<1x32xf32, #tpu.memory_space<vmem>>, %arg13: memref<1x1x32xf32, #tpu.memory_space<vmem>>) attributes {dimension_semantics = [#tpu.dimension_semantics<parallel>], iteration_bounds = array<i64: 2>, scalar_prefetch = 0 : i64, scratch_operands = 0 : i64, tpu.core_type = #tpu.core_type<tc>, window_params = [{transform_indices = @transform_0, window_bounds = array<i64: 1, 128, 3>}, {pipeline_mode = #tpu.pipeline_mode<synchronous>, transform_indices = @transform_1, window_bounds = array<i64: 3, 64>}, {pipeline_mode = #tpu.pipeline_mode<synchronous>, transform_indices = @transform_2, window_bounds = array<i64: 1, 64>}, {pipeline_mode = #tpu.pipeline_mode<synchronous>, transform_indices = @transform_3, window_bounds = array<i64: 64, 32>}, {pipeline_mode = #tpu.pipeline_mode<synchronous>, transform_indices = @transform_4, window_bounds = array<i64: 1, 32>}, {pipeline_mode = #tpu.pipeline_mode<synchronous>, transform_indices = @transform_5, window_bounds = array<i64: 3, 32, 32>}, {pipeline_mode = #tpu.pipeline_mode<synchronous>, transform_indices = @transform_6, window_bounds = array<i64: 3, 32, 32>}, {pipeline_mode = #tpu.pipeline_mode<synchronous>, transform_indices = @transform_7, window_bounds = array<i64: 3, 1, 32>}, {pipeline_mode = #tpu.pipeline_mode<synchronous>, transform_indices = @transform_8, window_bounds = array<i64: 32, 32>}, {pipeline_mode = #tpu.pipeline_mode<synchronous>, transform_indices = @transform_9, window_bounds = array<i64: 1, 32>}, {pipeline_mode = #tpu.pipeline_mode<synchronous>, transform_indices = @transform_10, window_bounds = array<i64: 32, 32>}, {pipeline_mode = #tpu.pipeline_mode<synchronous>, transform_indices = @transform_11, window_bounds = array<i64: 1, 32>}, {transform_indices = @transform_12, window_bounds = array<i64: 1, 1, 32>}]} {
    %c0 = arith.constant 0 : index
    %c0_0 = arith.constant 0 : index
    %c0_1 = arith.constant 0 : index
    %0 = vector.load %arg1[%c0, %c0_0, %c0_1] : memref<1x128x3xf32, #tpu.memory_space<vmem>>, vector<1x128x3xf32>
    %1 = vector.shape_cast %0 : vector<1x128x3xf32> to vector<128x3xf32>
    %2 = vector.extract_strided_slice %1 {offsets = [0, 0], sizes = [128, 1], strides = [1, 1]} : vector<128x3xf32> to vector<128x1xf32>
    %c0_2 = arith.constant 0 : index
    %c0_3 = arith.constant 0 : index
    %3 = vector.load %arg2[%c0_2, %c0_3] : memref<3x64xf32, #tpu.memory_space<vmem>>, vector<1x64xf32>
    %4 = vector.broadcast %2 : vector<128x1xf32> to vector<128x64xf32>
    %5 = vector.broadcast %3 : vector<1x64xf32> to vector<128x64xf32>
    %6 = arith.mulf %4, %5 : vector<128x64xf32>
    %7 = vector.extract_strided_slice %1 {offsets = [0, 1], sizes = [128, 1], strides = [1, 1]} : vector<128x3xf32> to vector<128x1xf32>
    %c1 = arith.constant 1 : index
    %c0_4 = arith.constant 0 : index
    %8 = vector.load %arg2[%c1, %c0_4] : memref<3x64xf32, #tpu.memory_space<vmem>>, vector<1x64xf32>
    %9 = vector.broadcast %7 : vector<128x1xf32> to vector<128x64xf32>
    %10 = vector.broadcast %8 : vector<1x64xf32> to vector<128x64xf32>
    %11 = arith.mulf %9, %10 : vector<128x64xf32>
    %12 = arith.addf %6, %11 : vector<128x64xf32>
    %13 = vector.extract_strided_slice %1 {offsets = [0, 2], sizes = [128, 1], strides = [1, 1]} : vector<128x3xf32> to vector<128x1xf32>
    %c2 = arith.constant 2 : index
    %c0_5 = arith.constant 0 : index
    %14 = vector.load %arg2[%c2, %c0_5] : memref<3x64xf32, #tpu.memory_space<vmem>>, vector<1x64xf32>
    %15 = vector.broadcast %13 : vector<128x1xf32> to vector<128x64xf32>
    %16 = vector.broadcast %14 : vector<1x64xf32> to vector<128x64xf32>
    %17 = arith.mulf %15, %16 : vector<128x64xf32>
    %18 = arith.addf %12, %17 : vector<128x64xf32>
    %c0_6 = arith.constant 0 : index
    %c0_7 = arith.constant 0 : index
    %19 = vector.load %arg3[%c0_6, %c0_7] : memref<1x64xf32, #tpu.memory_space<vmem>>, vector<1x64xf32>
    %20 = vector.broadcast %19 : vector<1x64xf32> to vector<128x64xf32>
    %21 = arith.addf %18, %20 : vector<128x64xf32>
    %cst = arith.constant 0.000000e+00 : f32
    %22 = vector.broadcast %cst : f32 to vector<128x64xf32>
    %23 = arith.maximumf %21, %22 : vector<128x64xf32>
    %c0_8 = arith.constant 0 : index
    %c0_9 = arith.constant 0 : index
    %24 = vector.load %arg4[%c0_8, %c0_9] : memref<64x32xf32, #tpu.memory_space<vmem>>, vector<64x32xf32>
    %cst_10 = arith.constant dense<0.000000e+00> : vector<128x32xf32>
    %25 = tpu.matmul %23, %24, %cst_10 {dimension_numbers = #tpu.dot_dimension_numbers<[1], [0], [0], [1], [0, 0, 1, 1], [], []>} : vector<128x64xf32>, vector<64x32xf32>, vector<128x32xf32> -> vector<128x32xf32>
    %c0_11 = arith.constant 0 : index
    %c0_12 = arith.constant 0 : index
    %26 = vector.load %arg5[%c0_11, %c0_12] : memref<1x32xf32, #tpu.memory_space<vmem>>, vector<1x32xf32>
    %27 = vector.broadcast %26 : vector<1x32xf32> to vector<128x32xf32>
    %28 = arith.addf %25, %27 : vector<128x32xf32>
    %cst_13 = arith.constant dense<0xFF800000> : vector<32xf32>
    %29 = vector.multi_reduction <maximumf>, %28, %cst_13 [0] : vector<128x32xf32> to vector<32xf32>
    %30 = vector.shape_cast %29 : vector<32xf32> to vector<1x32xf32>
    %cst_14 = arith.constant 0.000000e+00 : f32
    %31 = vector.broadcast %cst_14 : f32 to vector<128x32xf32>
    %32 = arith.maximumf %28, %31 : vector<128x32xf32>
    %cst_15 = arith.constant 0.000000e+00 : f32
    %33 = vector.broadcast %cst_15 : f32 to vector<1x32xf32>
    %34 = arith.maximumf %30, %33 : vector<1x32xf32>
    %c0_16 = arith.constant 0 : index
    %c0_17 = arith.constant 0 : index
    %c0_18 = arith.constant 0 : index
    %35 = vector.load %arg6[%c0_16, %c0_17, %c0_18] : memref<3x32x32xf32, #tpu.memory_space<vmem>>, vector<1x32x32xf32>
    %36 = vector.shape_cast %35 : vector<1x32x32xf32> to vector<32x32xf32>
    %cst_19 = arith.constant dense<0.000000e+00> : vector<128x32xf32>
    %37 = tpu.matmul %32, %36, %cst_19 {dimension_numbers = #tpu.dot_dimension_numbers<[1], [0], [0], [1], [0, 0, 1, 1], [], []>} : vector<128x32xf32>, vector<32x32xf32>, vector<128x32xf32> -> vector<128x32xf32>
    %c0_20 = arith.constant 0 : index
    %c0_21 = arith.constant 0 : index
    %c0_22 = arith.constant 0 : index
    %38 = vector.load %arg7[%c0_20, %c0_21, %c0_22] : memref<3x32x32xf32, #tpu.memory_space<vmem>>, vector<1x32x32xf32>
    %39 = vector.shape_cast %38 : vector<1x32x32xf32> to vector<32x32xf32>
    %cst_23 = arith.constant dense<0.000000e+00> : vector<1x32xf32>
    %40 = tpu.matmul %34, %39, %cst_23 {dimension_numbers = #tpu.dot_dimension_numbers<[1], [0], [0], [1], [0, 0, 1, 1], [], []>} : vector<1x32xf32>, vector<32x32xf32>, vector<1x32xf32> -> vector<1x32xf32>
    %41 = vector.broadcast %40 : vector<1x32xf32> to vector<128x32xf32>
    %42 = arith.addf %37, %41 : vector<128x32xf32>
    %c0_24 = arith.constant 0 : index
    %c0_25 = arith.constant 0 : index
    %c0_26 = arith.constant 0 : index
    %43 = vector.load %arg8[%c0_24, %c0_25, %c0_26] : memref<3x1x32xf32, #tpu.memory_space<vmem>>, vector<1x1x32xf32>
    %44 = vector.shape_cast %43 : vector<1x1x32xf32> to vector<1x32xf32>
    %45 = vector.broadcast %44 : vector<1x32xf32> to vector<128x32xf32>
    %46 = arith.addf %42, %45 : vector<128x32xf32>
    %cst_27 = arith.constant dense<0xFF800000> : vector<32xf32>
    %47 = vector.multi_reduction <maximumf>, %46, %cst_27 [0] : vector<128x32xf32> to vector<32xf32>
    %48 = vector.shape_cast %47 : vector<32xf32> to vector<1x32xf32>
    %cst_28 = arith.constant 0.000000e+00 : f32
    %49 = vector.broadcast %cst_28 : f32 to vector<128x32xf32>
    %50 = arith.maximumf %46, %49 : vector<128x32xf32>
    %cst_29 = arith.constant 0.000000e+00 : f32
    %51 = vector.broadcast %cst_29 : f32 to vector<1x32xf32>
    %52 = arith.maximumf %48, %51 : vector<1x32xf32>
    %c1_30 = arith.constant 1 : index
    %c0_31 = arith.constant 0 : index
    %c0_32 = arith.constant 0 : index
    %53 = vector.load %arg6[%c1_30, %c0_31, %c0_32] : memref<3x32x32xf32, #tpu.memory_space<vmem>>, vector<1x32x32xf32>
    %54 = vector.shape_cast %53 : vector<1x32x32xf32> to vector<32x32xf32>
    %cst_33 = arith.constant dense<0.000000e+00> : vector<128x32xf32>
    %55 = tpu.matmul %50, %54, %cst_33 {dimension_numbers = #tpu.dot_dimension_numbers<[1], [0], [0], [1], [0, 0, 1, 1], [], []>} : vector<128x32xf32>, vector<32x32xf32>, vector<128x32xf32> -> vector<128x32xf32>
    %c1_34 = arith.constant 1 : index
    %c0_35 = arith.constant 0 : index
    %c0_36 = arith.constant 0 : index
    %56 = vector.load %arg7[%c1_34, %c0_35, %c0_36] : memref<3x32x32xf32, #tpu.memory_space<vmem>>, vector<1x32x32xf32>
    %57 = vector.shape_cast %56 : vector<1x32x32xf32> to vector<32x32xf32>
    %cst_37 = arith.constant dense<0.000000e+00> : vector<1x32xf32>
    %58 = tpu.matmul %52, %57, %cst_37 {dimension_numbers = #tpu.dot_dimension_numbers<[1], [0], [0], [1], [0, 0, 1, 1], [], []>} : vector<1x32xf32>, vector<32x32xf32>, vector<1x32xf32> -> vector<1x32xf32>
    %59 = vector.broadcast %58 : vector<1x32xf32> to vector<128x32xf32>
    %60 = arith.addf %55, %59 : vector<128x32xf32>
    %c1_38 = arith.constant 1 : index
    %c0_39 = arith.constant 0 : index
    %c0_40 = arith.constant 0 : index
    %61 = vector.load %arg8[%c1_38, %c0_39, %c0_40] : memref<3x1x32xf32, #tpu.memory_space<vmem>>, vector<1x1x32xf32>
    %62 = vector.shape_cast %61 : vector<1x1x32xf32> to vector<1x32xf32>
    %63 = vector.broadcast %62 : vector<1x32xf32> to vector<128x32xf32>
    %64 = arith.addf %60, %63 : vector<128x32xf32>
    %cst_41 = arith.constant dense<0xFF800000> : vector<32xf32>
    %65 = vector.multi_reduction <maximumf>, %64, %cst_41 [0] : vector<128x32xf32> to vector<32xf32>
    %66 = vector.shape_cast %65 : vector<32xf32> to vector<1x32xf32>
    %cst_42 = arith.constant 0.000000e+00 : f32
    %67 = vector.broadcast %cst_42 : f32 to vector<128x32xf32>
    %68 = arith.maximumf %64, %67 : vector<128x32xf32>
    %cst_43 = arith.constant 0.000000e+00 : f32
    %69 = vector.broadcast %cst_43 : f32 to vector<1x32xf32>
    %70 = arith.maximumf %66, %69 : vector<1x32xf32>
    %c2_44 = arith.constant 2 : index
    %c0_45 = arith.constant 0 : index
    %c0_46 = arith.constant 0 : index
    %71 = vector.load %arg6[%c2_44, %c0_45, %c0_46] : memref<3x32x32xf32, #tpu.memory_space<vmem>>, vector<1x32x32xf32>
    %72 = vector.shape_cast %71 : vector<1x32x32xf32> to vector<32x32xf32>
    %cst_47 = arith.constant dense<0.000000e+00> : vector<128x32xf32>
    %73 = tpu.matmul %68, %72, %cst_47 {dimension_numbers = #tpu.dot_dimension_numbers<[1], [0], [0], [1], [0, 0, 1, 1], [], []>} : vector<128x32xf32>, vector<32x32xf32>, vector<128x32xf32> -> vector<128x32xf32>
    %c2_48 = arith.constant 2 : index
    %c0_49 = arith.constant 0 : index
    %c0_50 = arith.constant 0 : index
    %74 = vector.load %arg7[%c2_48, %c0_49, %c0_50] : memref<3x32x32xf32, #tpu.memory_space<vmem>>, vector<1x32x32xf32>
    %75 = vector.shape_cast %74 : vector<1x32x32xf32> to vector<32x32xf32>
    %cst_51 = arith.constant dense<0.000000e+00> : vector<1x32xf32>
    %76 = tpu.matmul %70, %75, %cst_51 {dimension_numbers = #tpu.dot_dimension_numbers<[1], [0], [0], [1], [0, 0, 1, 1], [], []>} : vector<1x32xf32>, vector<32x32xf32>, vector<1x32xf32> -> vector<1x32xf32>
    %77 = vector.broadcast %76 : vector<1x32xf32> to vector<128x32xf32>
    %78 = arith.addf %73, %77 : vector<128x32xf32>
    %c2_52 = arith.constant 2 : index
    %c0_53 = arith.constant 0 : index
    %c0_54 = arith.constant 0 : index
    %79 = vector.load %arg8[%c2_52, %c0_53, %c0_54] : memref<3x1x32xf32, #tpu.memory_space<vmem>>, vector<1x1x32xf32>
    %80 = vector.shape_cast %79 : vector<1x1x32xf32> to vector<1x32xf32>
    %81 = vector.broadcast %80 : vector<1x32xf32> to vector<128x32xf32>
    %82 = arith.addf %78, %81 : vector<128x32xf32>
    %cst_55 = arith.constant dense<0xFF800000> : vector<32xf32>
    %83 = vector.multi_reduction <maximumf>, %82, %cst_55 [0] : vector<128x32xf32> to vector<32xf32>
    %84 = vector.shape_cast %83 : vector<32xf32> to vector<1x32xf32>
    %cst_56 = arith.constant 0.000000e+00 : f32
    %85 = vector.broadcast %cst_56 : f32 to vector<1x32xf32>
    %86 = arith.maximumf %84, %85 : vector<1x32xf32>
    %c0_57 = arith.constant 0 : index
    %c0_58 = arith.constant 0 : index
    %87 = vector.load %arg9[%c0_57, %c0_58] : memref<32x32xf32, #tpu.memory_space<vmem>>, vector<32x32xf32>
    %cst_59 = arith.constant dense<0.000000e+00> : vector<1x32xf32>
    %88 = tpu.matmul %86, %87, %cst_59 {dimension_numbers = #tpu.dot_dimension_numbers<[1], [0], [0], [1], [0, 0, 1, 1], [], []>} : vector<1x32xf32>, vector<32x32xf32>, vector<1x32xf32> -> vector<1x32xf32>
    %c0_60 = arith.constant 0 : index
    %c0_61 = arith.constant 0 : index
    %89 = vector.load %arg10[%c0_60, %c0_61] : memref<1x32xf32, #tpu.memory_space<vmem>>, vector<1x32xf32>
    %90 = arith.addf %88, %89 : vector<1x32xf32>
    %c0_62 = arith.constant 0 : index
    %c0_63 = arith.constant 0 : index
    %91 = vector.load %arg11[%c0_62, %c0_63] : memref<32x32xf32, #tpu.memory_space<vmem>>, vector<32x32xf32>
    %cst_64 = arith.constant dense<0.000000e+00> : vector<1x32xf32>
    %92 = tpu.matmul %90, %91, %cst_64 {dimension_numbers = #tpu.dot_dimension_numbers<[1], [0], [0], [1], [0, 0, 1, 1], [], []>} : vector<1x32xf32>, vector<32x32xf32>, vector<1x32xf32> -> vector<1x32xf32>
    %c0_65 = arith.constant 0 : index
    %c0_66 = arith.constant 0 : index
    %93 = vector.load %arg12[%c0_65, %c0_66] : memref<1x32xf32, #tpu.memory_space<vmem>>, vector<1x32xf32>
    %94 = arith.addf %92, %93 : vector<1x32xf32>
    %c0_67 = arith.constant 0 : index
    %c0_68 = arith.constant 0 : index
    %c0_69 = arith.constant 0 : index
    %95 = vector.load %arg13[%c0_67, %c0_68, %c0_69] : memref<1x1x32xf32, #tpu.memory_space<vmem>>, vector<1x1x32xf32>
    %96 = vector.shape_cast %95 : vector<1x1x32xf32> to vector<1x32xf32>
    %97 = vector.shape_cast %94 : vector<1x32xf32> to vector<1x1x32xf32>
    tpu.vector_store %arg13[%c0_67, %c0_68, %c0_69], %97 {strides = array<i32>} : memref<1x1x32xf32, #tpu.memory_space<vmem>>, vector<1x1x32xf32>,
    return
  }
  func.func @transform_0(%arg0: i32) -> (i32, i32, i32) {
    %c0_i32 = arith.constant 0 : i32
    %c0_i32_0 = arith.constant 0 : i32
    %c0_i32_1 = arith.constant 0 : i32
    return %arg0, %c0_i32, %c0_i32_0 : i32, i32, i32
  }
  func.func @transform_1(%arg0: i32) -> (i32, i32) {
    %c0_i32 = arith.constant 0 : i32
    %c0_i32_0 = arith.constant 0 : i32
    %c0_i32_1 = arith.constant 0 : i32
    return %c0_i32, %c0_i32_0 : i32, i32
  }
  func.func @transform_2(%arg0: i32) -> (i32, i32) {
    %c0_i32 = arith.constant 0 : i32
    %c0_i32_0 = arith.constant 0 : i32
    %c0_i32_1 = arith.constant 0 : i32
    return %c0_i32, %c0_i32_0 : i32, i32
  }
  func.func @transform_3(%arg0: i32) -> (i32, i32) {
    %c0_i32 = arith.constant 0 : i32
    %c0_i32_0 = arith.constant 0 : i32
    %c0_i32_1 = arith.constant 0 : i32
    return %c0_i32, %c0_i32_0 : i32, i32
  }
  func.func @transform_4(%arg0: i32) -> (i32, i32) {
    %c0_i32 = arith.constant 0 : i32
    %c0_i32_0 = arith.constant 0 : i32
    %c0_i32_1 = arith.constant 0 : i32
    return %c0_i32, %c0_i32_0 : i32, i32
  }
  func.func @transform_5(%arg0: i32) -> (i32, i32, i32) {
    %c0_i32 = arith.constant 0 : i32
    %c0_i32_0 = arith.constant 0 : i32
    %c0_i32_1 = arith.constant 0 : i32
    %c0_i32_2 = arith.constant 0 : i32
    return %c0_i32, %c0_i32_0, %c0_i32_1 : i32, i32, i32
  }
  func.func @transform_6(%arg0: i32) -> (i32, i32, i32) {
    %c0_i32 = arith.constant 0 : i32
    %c0_i32_0 = arith.constant 0 : i32
    %c0_i32_1 = arith.constant 0 : i32
    %c0_i32_2 = arith.constant 0 : i32
    return %c0_i32, %c0_i32_0, %c0_i32_1 : i32, i32, i32
  }
  func.func @transform_7(%arg0: i32) -> (i32, i32, i32) {
    %c0_i32 = arith.constant 0 : i32
    %c0_i32_0 = arith.constant 0 : i32
    %c0_i32_1 = arith.constant 0 : i32
    %c0_i32_2 = arith.constant 0 : i32
    return %c0_i32, %c0_i32_0, %c0_i32_1 : i32, i32, i32
  }
  func.func @transform_8(%arg0: i32) -> (i32, i32) {
    %c0_i32 = arith.constant 0 : i32
    %c0_i32_0 = arith.constant 0 : i32
    %c0_i32_1 = arith.constant 0 : i32
    return %c0_i32, %c0_i32_0 : i32, i32
  }
  func.func @transform_9(%arg0: i32) -> (i32, i32) {
    %c0_i32 = arith.constant 0 : i32
    %c0_i32_0 = arith.constant 0 : i32
    %c0_i32_1 = arith.constant 0 : i32
    return %c0_i32, %c0_i32_0 : i32, i32
  }
  func.func @transform_10(%arg0: i32) -> (i32, i32) {
    %c0_i32 = arith.constant 0 : i32
    %c0_i32_0 = arith.constant 0 : i32
    %c0_i32_1 = arith.constant 0 : i32
    return %c0_i32, %c0_i32_0 : i32, i32
  }
  func.func @transform_11(%arg0: i32) -> (i32, i32) {
    %c0_i32 = arith.constant 0 : i32
    %c0_i32_0 = arith.constant 0 : i32
    %c0_i32_1 = arith.constant 0 : i32
    return %c0_i32, %c0_i32_0 : i32, i32
  }
  func.func @transform_12(%arg0: i32) -> (i32, i32, i32) {
    %c0_i32 = arith.constant 0 : i32
    %c0_i32_0 = arith.constant 0 : i32
    %c0_i32_1 = arith.constant 0 : i32
    return %arg0, %c0_i32, %c0_i32_0 : i32, i32, i32
  }
}

</mosaic_0001>

<llo_original>
// kernel: tpu_custom_call.1
$region0: #{tpu_custom_call.1}
  #allocation0 [shape = 'u32[]', space=smem, size = 0x4, offset = 0x4, fixed_abs, tag = 'smem constant byte address 0x4 - core index']
  #allocation1 [shape = 'u32[144,128]{1,0:T(1,128)}', space=vmem, size = 0x12000, scoped, tag = 'internal scratch']
  %s0 = inlined_call_operand.vmem [shape: f32[2,128,3], index: 0, kind: input, shape index: {}]
  %s1 = inlined_call_operand.vmem [shape: f32[3,64], index: 1, kind: input, shape index: {}]
  %s2 = inlined_call_operand.vmem [shape: f32[1,64], index: 2, kind: input, shape index: {}]
  %s3 = inlined_call_operand.vmem [shape: f32[64,32], index: 3, kind: input, shape index: {}]
  %s4 = inlined_call_operand.vmem [shape: f32[1,32], index: 4, kind: input, shape index: {}]
  %s5 = inlined_call_operand.vmem [shape: f32[3,32,32], index: 5, kind: input, shape index: {}]
  %s6 = inlined_call_operand.vmem [shape: f32[3,32,32], index: 6, kind: input, shape index: {}]
  %s7 = inlined_call_operand.vmem [shape: f32[3,1,32], index: 7, kind: input, shape index: {}]
  %s8 = inlined_call_operand.vmem [shape: f32[32,32], index: 8, kind: input, shape index: {}]
  %s9 = inlined_call_operand.vmem [shape: f32[1,32], index: 9, kind: input, shape index: {}]
  %s10 = inlined_call_operand.vmem [shape: f32[32,32], index: 10, kind: input, shape index: {}]
  %s11 = inlined_call_operand.vmem [shape: f32[1,32], index: 11, kind: input, shape index: {}]
  %s12 = inlined_call_operand.hbm [shape: f32[2,1,32], index: 12, kind: output, shape index: {}]
  %s13 = sld [smem:[#allocation0]]
  $region81: #{tpu_custom_call.1} parent=0
    _
  %s15 = ssub.s32 1, %s13
  %s16 = scalar_select 0, %s15, %s13
  $region1: #{tpu_custom_call.1} parent=0
    #allocation2 [shape = 'u8[1024]{0}', space=vmem, size = 0x400, scoped, tag = 'output window, operand 0']
    #allocation3 [shape = 's32[2]{0}', space=sflag, size = 0x8, scoped, tag = 'scoped memory for tpu_custom_call.1']
    %17 = vsyncpa [#allocation3], 0
    %s18 = scalar_lea.sflag [#allocation3], 1
    %19 = vsyncpa %s18, 0
    loop: start=0, step=1, limit=4
    $region2: #{tpu_custom_call.1} parent=1 // loop_pre_header
      _
    $region3: #{tpu_custom_call.1} parent=1 // loop_header
      %s21 = sphi 0, %s25
      %p22 = scmp.ge.s32.totalorder %s21, 4
      %s31 = sphi 0, %s33
      %s34 = sphi 0, %s31
      %s35 = sphi 0, %s34
      %s51 = sphi 0, %s35
      %s55 = sphi 0, %s55
      %s57 = sphi 0, %s55
      %s58 = sphi 0, %s57
      %s72 = sphi 0, %s58
      %s76 = sphi 0, %s76
      %s78 = sphi 0, %s76
      %s79 = sphi 0, %s78
      %s93 = sphi 0, %s79
      %s97 = sphi 0, %s97
      %s99 = sphi 0, %s97
      %s100 = sphi 0, %s99
      %s114 = sphi 0, %s100
      %s118 = sphi 0, %s118
      %s120 = sphi 0, %s118
      %s121 = sphi 0, %s120
      %s135 = sphi 0, %s121
      %s139 = sphi 0, %s139
      %s141 = sphi 0, %s139
      %s142 = sphi 0, %s141
      %s156 = sphi 0, %s142
      %s160 = sphi 0, %s160
      %s162 = sphi 0, %s160
      %s163 = sphi 0, %s162
      %s177 = sphi 0, %s163
      %s181 = sphi 0, %s181
      %s183 = sphi 0, %s181
      %s184 = sphi 0, %s183
      %s198 = sphi 0, %s184
      %s202 = sphi 0, %s202
      %s204 = sphi 0, %s202
      %s205 = sphi 0, %s204
      %s219 = sphi 0, %s205
      %s223 = sphi 0, %s223
      %s225 = sphi 0, %s223
      %s226 = sphi 0, %s225
      %s240 = sphi 0, %s226
      %s244 = sphi 0, %s244
      %s246 = sphi 0, %s244
      %s247 = sphi 0, %s246
      %s261 = sphi 0, %s247
      %s265 = sphi 0, %s265
      %s267 = sphi 0, %s265
      %s268 = sphi 0, %s267
      %s282 = sphi 0, %s268
      %s288 = sphi 0, %s290
      %s291 = sphi 0, %s288
      %s292 = sphi 0, %s291
      %s308 = sphi 0, %s292
    $region4: #{tpu_custom_call.1} parent=1 // loop_header_branch
      %24 = sbr.rel (%p22) target = $region8
    $region5: #{tpu_custom_call.1} parent=1 // loop_body
      %s26 = ssub.s32 %s21, 1
      %s27 = ssub.s32 %s21, 2
      %s28 = sadd.s32 %s21, 1
      %s29 = ssub.s32 %s21, %s28
      %p30 = scmp.eq.s32.totalorder %s29, 0
      %s32 = sadd.s32 %s31, 1
      %s33 = scalar_select %p30, %s31, %s32
      %p36 = pneg %p30
      %p37 = scmp.eq.s32.totalorder %s21, 1
      %p38 = por %p36, %p37
      %p39 = scmp.ne.s32.totalorder %s31, %s34
      %p40 = scmp.eq.s32.totalorder %s21, 0
      %p41 = por %p39, %p40
      %p42 = scmp.ne.s32.totalorder %s31, %s34
      %p43 = scmp.eq.s32.totalorder %s26, 1
      %p44 = por %p42, %p43
      %p45 = scmp.ne.s32.totalorder %s34, %s35
      %p46 = scmp.eq.s32.totalorder %s26, 0
      %p47 = por %p45, %p46
      %p48 = scmp.ne.s32.totalorder %s34, %s35
      %p49 = scmp.eq.s32.totalorder %s27, 1
      %p50 = por %p48, %p49
      %p52 = scmp.ne.s32.totalorder %s35, %s51
      %p53 = scmp.eq.s32.totalorder %s27, 0
      %p54 = por %p52, %p53
      %s56 = sadd.s32 %s55, 1
      %p59 = scmp.eq.s32.totalorder %s21, 1
      %p60 = scmp.ne.s32.totalorder %s55, %s57
      %p61 = scmp.eq.s32.totalorder %s21, 0
      %p62 = por %p60, %p61
      %p63 = scmp.ne.s32.totalorder %s55, %s57
      %p64 = scmp.eq.s32.totalorder %s26, 1
      %p65 = por %p63, %p64
      %p66 = scmp.ne.s32.totalorder %s57, %s58
      %p67 = scmp.eq.s32.totalorder %s26, 0
      %p68 = por %p66, %p67
      %p69 = scmp.ne.s32.totalorder %s57, %s58
      %p70 = scmp.eq.s32.totalorder %s27, 1
      %p71 = por %p69, %p70
      %p73 = scmp.ne.s32.totalorder %s58, %s72
      %p74 = scmp.eq.s32.totalorder %s27, 0
      %p75 = por %p73, %p74
      %s77 = sadd.s32 %s76, 1
      %p80 = scmp.eq.s32.totalorder %s21, 1
      %p81 = scmp.ne.s32.totalorder %s76, %s78
      %p82 = scmp.eq.s32.totalorder %s21, 0
      %p83 = por %p81, %p82
      %p84 = scmp.ne.s32.totalorder %s76, %s78
      %p85 = scmp.eq.s32.totalorder %s26, 1
      %p86 = por %p84, %p85
      %p87 = scmp.ne.s32.totalorder %s78, %s79
      %p88 = scmp.eq.s32.totalorder %s26, 0
      %p89 = por %p87, %p88
      %p90 = scmp.ne.s32.totalorder %s78, %s79
      %p91 = scmp.eq.s32.totalorder %s27, 1
      %p92 = por %p90, %p91
      %p94 = scmp.ne.s32.totalorder %s79, %s93
      %p95 = scmp.eq.s32.totalorder %s27, 0
      %p96 = por %p94, %p95
      %s98 = sadd.s32 %s97, 1
      %p101 = scmp.eq.s32.totalorder %s21, 1
      %p102 = scmp.ne.s32.totalorder %s97, %s99
      %p103 = scmp.eq.s32.totalorder %s21, 0
      %p104 = por %p102, %p103
      %p105 = scmp.ne.s32.totalorder %s97, %s99
      %p106 = scmp.eq.s32.totalorder %s26, 1
      %p107 = por %p105, %p106
      %p108 = scmp.ne.s32.totalorder %s99, %s100
      %p109 = scmp.eq.s32.totalorder %s26, 0
      %p110 = por %p108, %p109
      %p111 = scmp.ne.s32.totalorder %s99, %s100
      %p112 = scmp.eq.s32.totalorder %s27, 1
      %p113 = por %p111, %p112
      %p115 = scmp.ne.s32.totalorder %s100, %s114
      %p116 = scmp.eq.s32.totalorder %s27, 0
      %p117 = por %p115, %p116
      %s119 = sadd.s32 %s118, 1
      %p122 = scmp.eq.s32.totalorder %s21, 1
      %p123 = scmp.ne.s32.totalorder %s118, %s120
      %p124 = scmp.eq.s32.totalorder %s21, 0
      %p125 = por %p123, %p124
      %p126 = scmp.ne.s32.totalorder %s118, %s120
      %p127 = scmp.eq.s32.totalorder %s26, 1
      %p128 = por %p126, %p127
      %p129 = scmp.ne.s32.totalorder %s120, %s121
      %p130 = scmp.eq.s32.totalorder %s26, 0
      %p131 = por %p129, %p130
      %p132 = scmp.ne.s32.totalorder %s120, %s121
      %p133 = scmp.eq.s32.totalorder %s27, 1
      %p134 = por %p132, %p133
      %p136 = scmp.ne.s32.totalorder %s121, %s135
      %p137 = scmp.eq.s32.totalorder %s27, 0
      %p138 = por %p136, %p137
      %s140 = sadd.s32 %s139, 1
      %p143 = scmp.eq.s32.totalorder %s21, 1
      %p144 = scmp.ne.s32.totalorder %s139, %s141
      %p145 = scmp.eq.s32.totalorder %s21, 0
      %p146 = por %p144, %p145
      %p147 = scmp.ne.s32.totalorder %s139, %s141
      %p148 = scmp.eq.s32.totalorder %s26, 1
      %p149 = por %p147, %p148
      %p150 = scmp.ne.s32.totalorder %s141, %s142
      %p151 = scmp.eq.s32.totalorder %s26, 0
      %p152 = por %p150, %p151
      %p153 = scmp.ne.s32.totalorder %s141, %s142
      %p154 = scmp.eq.s32.totalorder %s27, 1
      %p155 = por %p153, %p154
      %p157 = scmp.ne.s32.totalorder %s142, %s156
      %p158 = scmp.eq.s32.totalorder %s27, 0
      %p159 = por %p157, %p158
      %s161 = sadd.s32 %s160, 1
      %p164 = scmp.eq.s32.totalorder %s21, 1
      %p165 = scmp.ne.s32.totalorder %s160, %s162
      %p166 = scmp.eq.s32.totalorder %s21, 0
      %p167 = por %p165, %p166
      %p168 = scmp.ne.s32.totalorder %s160, %s162
      %p169 = scmp.eq.s32.totalorder %s26, 1
      %p170 = por %p168, %p169
      %p171 = scmp.ne.s32.totalorder %s162, %s163
      %p172 = scmp.eq.s32.totalorder %s26, 0
      %p173 = por %p171, %p172
      %p174 = scmp.ne.s32.totalorder %s162, %s163
      %p175 = scmp.eq.s32.totalorder %s27, 1
      %p176 = por %p174, %p175
      %p178 = scmp.ne.s32.totalorder %s163, %s177
      %p179 = scmp.eq.s32.totalorder %s27, 0
      %p180 = por %p178, %p179
      %s182 = sadd.s32 %s181, 1
      %p185 = scmp.eq.s32.totalorder %s21, 1
      %p186 = scmp.ne.s32.totalorder %s181, %s183
      %p187 = scmp.eq.s32.totalorder %s21, 0
      %p188 = por %p186, %p187
      %p189 = scmp.ne.s32.totalorder %s181, %s183
      %p190 = scmp.eq.s32.totalorder %s26, 1
      %p191 = por %p189, %p190
      %p192 = scmp.ne.s32.totalorder %s183, %s184
      %p193 = scmp.eq.s32.totalorder %s26, 0
      %p194 = por %p192, %p193
      %p195 = scmp.ne.s32.totalorder %s183, %s184
      %p196 = scmp.eq.s32.totalorder %s27, 1
      %p197 = por %p195, %p196
      %p199 = scmp.ne.s32.totalorder %s184, %s198
      %p200 = scmp.eq.s32.totalorder %s27, 0
      %p201 = por %p199, %p200
      %s203 = sadd.s32 %s202, 1
      %p206 = scmp.eq.s32.totalorder %s21, 1
      %p207 = scmp.ne.s32.totalorder %s202, %s204
      %p208 = scmp.eq.s32.totalorder %s21, 0
      %p209 = por %p207, %p208
      %p210 = scmp.ne.s32.totalorder %s202, %s204
      %p211 = scmp.eq.s32.totalorder %s26, 1
      %p212 = por %p210, %p211
      %p213 = scmp.ne.s32.totalorder %s204, %s205
      %p214 = scmp.eq.s32.totalorder %s26, 0
      %p215 = por %p213, %p214
      %p216 = scmp.ne.s32.totalorder %s204, %s205
      %p217 = scmp.eq.s32.totalorder %s27, 1
      %p218 = por %p216, %p217
      %p220 = scmp.ne.s32.totalorder %s205, %s219
      %p221 = scmp.eq.s32.totalorder %s27, 0
      %p222 = por %p220, %p221
      %s224 = sadd.s32 %s223, 1
      %p227 = scmp.eq.s32.totalorder %s21, 1
      %p228 = scmp.ne.s32.totalorder %s223, %s225
      %p229 = scmp.eq.s32.totalorder %s21, 0
      %p230 = por %p228, %p229
      %p231 = scmp.ne.s32.totalorder %s223, %s225
      %p232 = scmp.eq.s32.totalorder %s26, 1
      %p233 = por %p231, %p232
      %p234 = scmp.ne.s32.totalorder %s225, %s226
      %p235 = scmp.eq.s32.totalorder %s26, 0
      %p236 = por %p234, %p235
      %p237 = scmp.ne.s32.totalorder %s225, %s226
      %p238 = scmp.eq.s32.totalorder %s27, 1
      %p239 = por %p237, %p238
      %p241 = scmp.ne.s32.totalorder %s226, %s240
      %p242 = scmp.eq.s32.totalorder %s27, 0
      %p243 = por %p241, %p242
      %s245 = sadd.s32 %s244, 1
      %p248 = scmp.eq.s32.totalorder %s21, 1
      %p249 = scmp.ne.s32.totalorder %s244, %s246
      %p250 = scmp.eq.s32.totalorder %s21, 0
      %p251 = por %p249, %p250
      %p252 = scmp.ne.s32.totalorder %s244, %s246
      %p253 = scmp.eq.s32.totalorder %s26, 1
      %p254 = por %p252, %p253
      %p255 = scmp.ne.s32.totalorder %s246, %s247
      %p256 = scmp.eq.s32.totalorder %s26, 0
      %p257 = por %p255, %p256
      %p258 = scmp.ne.s32.totalorder %s246, %s247
      %p259 = scmp.eq.s32.totalorder %s27, 1
      %p260 = por %p258, %p259
      %p262 = scmp.ne.s32.totalorder %s247, %s261
      %p263 = scmp.eq.s32.totalorder %s27, 0
      %p264 = por %p262, %p263
      %s266 = sadd.s32 %s265, 1
      %p269 = scmp.eq.s32.totalorder %s21, 1
      %p270 = scmp.ne.s32.totalorder %s265, %s267
      %p271 = scmp.eq.s32.totalorder %s21, 0
      %p272 = por %p270, %p271
      %p273 = scmp.ne.s32.totalorder %s265, %s267
      %p274 = scmp.eq.s32.totalorder %s26, 1
      %p275 = por %p273, %p274
      %p276 = scmp.ne.s32.totalorder %s267, %s268
      %p277 = scmp.eq.s32.totalorder %s26, 0
      %p278 = por %p276, %p277
      %p279 = scmp.ne.s32.totalorder %s267, %s268
      %p280 = scmp.eq.s32.totalorder %s27, 1
      %p281 = por %p279, %p280
      %p283 = scmp.ne.s32.totalorder %s268, %s282
      %p284 = scmp.eq.s32.totalorder %s27, 0
      %p285 = por %p283, %p284
      %s286 = ssub.s32 %s21, %s28
      %p287 = scmp.eq.s32.totalorder %s286, 0
      %s289 = sadd.s32 %s288, 1
      %s290 = scalar_select %p287, %s288, %s289
      %p293 = pneg %p287
      %p294 = scmp.eq.s32.totalorder %s21, 1
      %p295 = por %p293, %p294
      %p296 = scmp.ne.s32.totalorder %s288, %s291
      %p297 = scmp.eq.s32.totalorder %s21, 0
      %p298 = por %p296, %p297
      %p299 = scmp.ne.s32.totalorder %s288, %s291
      %p300 = scmp.eq.s32.totalorder %s26, 1
      %p301 = por %p299, %p300
      %p302 = scmp.ne.s32.totalorder %s291, %s292
      %p303 = scmp.eq.s32.totalorder %s26, 0
      %p304 = por %p302, %p303
      %p305 = scmp.ne.s32.totalorder %s291, %s292
      %p306 = scmp.eq.s32.totalorder %s27, 1
      %p307 = por %p305, %p306
      %p309 = scmp.ne.s32.totalorder %s292, %s308
      %p310 = scmp.eq.s32.totalorder %s27, 0
      %p311 = por %p309, %p310
      %p312 = scmp.le.s32.totalorder 1, %s21
      %p313 = scmp.lt.s32.totalorder %s21, 3
      %p314 = pnand %p312, %p313
      %p315 = pneg %p314
      // Predicated region
      $region9: #{tpu_custom_call.1} parent=5 // pred_check
        _
      $region10: #{tpu_custom_call.1} parent=5 // pred_check_branch
        %317 = sbr.rel (%p314) target = $region12
      $region11: #{tpu_custom_call.1} parent=5 // pred_region
        %s318 = ssub.s32 %s21, 1
        // Predicated region
        $region13: #{tpu_custom_call.1} parent=11 // pred_check
          %p319 = pneg %p68
        $region14: #{tpu_custom_call.1} parent=11 // pred_check_branch
          %321 = sbr.rel (%p319) target = $region16
        $region15: #{tpu_custom_call.1} parent=11 // pred_region
          _
        $region16: #{tpu_custom_call.1} parent=11 // pred_fallthru
          _
        // Predicated region
        $region17: #{tpu_custom_call.1} parent=11 // pred_check
          %p322 = pneg %p89
        $region18: #{tpu_custom_call.1} parent=11 // pred_check_branch
          %324 = sbr.rel (%p322) target = $region20
        $region19: #{tpu_custom_call.1} parent=11 // pred_region
          _
        $region20: #{tpu_custom_call.1} parent=11 // pred_fallthru
          _
        // Predicated region
        $region21: #{tpu_custom_call.1} parent=11 // pred_check
          %p325 = pneg %p110
        $region22: #{tpu_custom_call.1} parent=11 // pred_check_branch
          %327 = sbr.rel (%p325) target = $region24
        $region23: #{tpu_custom_call.1} parent=11 // pred_region
          _
        $region24: #{tpu_custom_call.1} parent=11 // pred_fallthru
          _
        // Predicated region
        $region25: #{tpu_custom_call.1} parent=11 // pred_check
          %p328 = pneg %p131
        $region26: #{tpu_custom_call.1} parent=11 // pred_check_branch
          %330 = sbr.rel (%p328) target = $region28
        $region27: #{tpu_custom_call.1} parent=11 // pred_region
          _
        $region28: #{tpu_custom_call.1} parent=11 // pred_fallthru
          _
        // Predicated region
        $region29: #{tpu_custom_call.1} parent=11 // pred_check
          %p331 = pneg %p152
        $region30: #{tpu_custom_call.1} parent=11 // pred_check_branch
          %333 = sbr.rel (%p331) target = $region32
        $region31: #{tpu_custom_call.1} parent=11 // pred_region
          _
        $region32: #{tpu_custom_call.1} parent=11 // pred_fallthru
          _
        // Predicated region
        $region33: #{tpu_custom_call.1} parent=11 // pred_check
          %p334 = pneg %p173
        $region34: #{tpu_custom_call.1} parent=11 // pred_check_branch
          %336 = sbr.rel (%p334) target = $region36
        $region35: #{tpu_custom_call.1} parent=11 // pred_region
          _
        $region36: #{tpu_custom_call.1} parent=11 // pred_fallthru
          _
        // Predicated region
        $region37: #{tpu_custom_call.1} parent=11 // pred_check
          %p337 = pneg %p194
        $region38: #{tpu_custom_call.1} parent=11 // pred_check_branch
          %339 = sbr.rel (%p337) target = $region40
        $region39: #{tpu_custom_call.1} parent=11 // pred_region
          _
        $region40: #{tpu_custom_call.1} parent=11 // pred_fallthru
          _
        // Predicated region
        $region41: #{tpu_custom_call.1} parent=11 // pred_check
          %p340 = pneg %p215
        $region42: #{tpu_custom_call.1} parent=11 // pred_check_branch
          %342 = sbr.rel (%p340) target = $region44
        $region43: #{tpu_custom_call.1} parent=11 // pred_region
          _
        $region44: #{tpu_custom_call.1} parent=11 // pred_fallthru
          _
        // Predicated region
        $region45: #{tpu_custom_call.1} parent=11 // pred_check
          %p343 = pneg %p236
        $region46: #{tpu_custom_call.1} parent=11 // pred_check_branch
          %345 = sbr.rel (%p343) target = $region48
        $region47: #{tpu_custom_call.1} parent=11 // pred_region
          _
        $region48: #{tpu_custom_call.1} parent=11 // pred_fallthru
          _
        // Predicated region
        $region49: #{tpu_custom_call.1} parent=11 // pred_check
          %p346 = pneg %p257
        $region50: #{tpu_custom_call.1} parent=11 // pred_check_branch
          %348 = sbr.rel (%p346) target = $region52
        $region51: #{tpu_custom_call.1} parent=11 // pred_region
          _
        $region52: #{tpu_custom_call.1} parent=11 // pred_fallthru
          _
        // Predicated region
        $region53: #{tpu_custom_call.1} parent=11 // pred_check
          %p349 = pneg %p278
        $region54: #{tpu_custom_call.1} parent=11 // pred_check_branch
          %351 = sbr.rel (%p349) target = $region56
        $region55: #{tpu_custom_call.1} parent=11 // pred_region
          _
        $region56: #{tpu_custom_call.1} parent=11 // pred_fallthru
          _
      $region12: #{tpu_custom_call.1} parent=5 // pred_fallthru
        _
      %p352 = scmp.lt.s32.totalorder %s21, 2
      // Predicated region
      $region57: #{tpu_custom_call.1} parent=5 // pred_check
        %p353 = pneg %p352
      $region58: #{tpu_custom_call.1} parent=5 // pred_check_branch
        %355 = sbr.rel (%p353) target = $region60
      $region59: #{tpu_custom_call.1} parent=5 // pred_region
        // Predicated region
        $region61: #{tpu_custom_call.1} parent=59 // pred_check
          %p356 = pneg %p41
        $region62: #{tpu_custom_call.1} parent=59 // pred_check_branch
          %358 = sbr.rel (%p356) target = $region64
        $region63: #{tpu_custom_call.1} parent=59 // pred_region
          %p359 = scmp.lt.s32.totalorder %s21, 1
          %s360 = scalar_select %p359, %s21, 1
          %s361 = smul.addr %s360, 16
          %s362 = smul.addr %s361, 8
          %s363 = scalar_lea.vmem %s0, %s362
        $region64: #{tpu_custom_call.1} parent=59 // pred_fallthru
          _
      $region60: #{tpu_custom_call.1} parent=5 // pred_fallthru
        _
      %p364 = scmp.le.s32.totalorder 1, %s21
      %p365 = scmp.lt.s32.totalorder %s21, 3
      %p366 = pnand %p364, %p365
      %p367 = pneg %p366
      // Predicated region
      $region65: #{tpu_custom_call.1} parent=5 // pred_check
        _
      $region66: #{tpu_custom_call.1} parent=5 // pred_check_branch
        %369 = sbr.rel (%p366) target = $region68
      $region67: #{tpu_custom_call.1} parent=5 // pred_region
        %s370 = ssub.s32 %s21, 1
        %p371 = scmp.lt.s32.totalorder %s26, 1
        %s372 = scalar_select %p371, %s26, 1
        %s373 = smul.addr %s372, 16
        %s374 = smul.addr %s373, 8
        %s375 = scalar_lea.vmem %s0, %s374
        %p376 = pneg %p47
        %p377 = pneg %p44
        %p378 = pneg %p68
        %p379 = pneg %p65
        %p380 = pneg %p89
        %p381 = pneg %p86
        %p382 = pneg %p110
        %p383 = pneg %p107
        %p384 = pneg %p131
        %p385 = pneg %p128
        %p386 = pneg %p152
        %p387 = pneg %p149
        %p388 = pneg %p173
        %p389 = pneg %p170
        %p390 = pneg %p194
        %p391 = pneg %p191
        %p392 = pneg %p215
        %p393 = pneg %p212
        %p394 = pneg %p236
        %p395 = pneg %p233
        %p396 = pneg %p257
        %p397 = pneg %p254
        %p398 = pneg %p278
        %p399 = pneg %p275
        %p400 = pneg %p304
        %p401 = pneg %p301
        %s402 = sand.u32 %s291, 1
        %s403 = scalar_lea.sflag [#allocation3], %s402
        %s404 = sand.u32 %s291, 1
        %s405 = scalar_lea.vmem [#allocation2], %s404
        %p406 = scmp.lt.s32.totalorder %s26, 1
        %s407 = scalar_select %p406, %s26, 1
        %s408 = smul.addr %s407, 16
        %s409 = smul.addr %s408, 8
        %s410 = scalar_lea.vmem %s0, %s409
        %v411 = vld [vmem:[%s410] sm:$0xff]
        %v412 = vld [vmem:[%s410 + $0x8] sm:$0xff]
        %v413 = vld [vmem:[%s410 + $0x10] sm:$0xff]
        %v414 = vld [vmem:[%s410 + $0x18] sm:$0xff]
        %v415 = vld [vmem:[%s410 + $0x20] sm:$0xff]
        %v416 = vld [vmem:[%s410 + $0x28] sm:$0xff]
        %v417 = vld [vmem:[%s410 + $0x30] sm:$0xff]
        %v418 = vld [vmem:[%s410 + $0x38] sm:$0xff]
        %v419 = vld [vmem:[%s410 + $0x40] sm:$0xff]
        %v420 = vld [vmem:[%s410 + $0x48] sm:$0xff]
        %v421 = vld [vmem:[%s410 + $0x50] sm:$0xff]
        %v422 = vld [vmem:[%s410 + $0x58] sm:$0xff]
        %v423 = vld [vmem:[%s410 + $0x60] sm:$0xff]
        %v424 = vld [vmem:[%s410 + $0x68] sm:$0xff]
        %v425 = vld [vmem:[%s410 + $0x70] sm:$0xff]
        %v426 = vld [vmem:[%s410 + $0x78] sm:$0xff]
        %v427 = vld [vmem:[%s1] sm:$0x1]
        %429 = vset.pattern.permute.xlu0 0
        %430 = vperm.xlu0 %429, %v411
        %v431 = vpop.permute.xlu0 %430
        %434 = vset.pattern.permute.xlu0 0
        %435 = vperm.xlu0 %434, %v412
        %v436 = vpop.permute.xlu0 %435
        %439 = vset.pattern.permute.xlu0 0
        %440 = vperm.xlu0 %439, %v413
        %v441 = vpop.permute.xlu0 %440
        %444 = vset.pattern.permute.xlu0 0
        %445 = vperm.xlu0 %444, %v414
        %v446 = vpop.permute.xlu0 %445
        %449 = vset.pattern.permute.xlu0 0
        %450 = vperm.xlu0 %449, %v415
        %v451 = vpop.permute.xlu0 %450
        %454 = vset.pattern.permute.xlu0 0
        %455 = vperm.xlu0 %454, %v416
        %v456 = vpop.permute.xlu0 %455
        %459 = vset.pattern.permute.xlu0 0
        %460 = vperm.xlu0 %459, %v417
        %v461 = vpop.permute.xlu0 %460
        %464 = vset.pattern.permute.xlu0 0
        %465 = vperm.xlu0 %464, %v418
        %v466 = vpop.permute.xlu0 %465
        %469 = vset.pattern.permute.xlu0 0
        %470 = vperm.xlu0 %469, %v419
        %v471 = vpop.permute.xlu0 %470
        %474 = vset.pattern.permute.xlu0 0
        %475 = vperm.xlu0 %474, %v420
        %v476 = vpop.permute.xlu0 %475
        %479 = vset.pattern.permute.xlu0 0
        %480 = vperm.xlu0 %479, %v421
        %v481 = vpop.permute.xlu0 %480
        %484 = vset.pattern.permute.xlu0 0
        %485 = vperm.xlu0 %484, %v422
        %v486 = vpop.permute.xlu0 %485
        %489 = vset.pattern.permute.xlu0 0
        %490 = vperm.xlu0 %489, %v423
        %v491 = vpop.permute.xlu0 %490
        %494 = vset.pattern.permute.xlu0 0
        %495 = vperm.xlu0 %494, %v424
        %v496 = vpop.permute.xlu0 %495
        %499 = vset.pattern.permute.xlu0 0
        %500 = vperm.xlu0 %499, %v425
        %v501 = vpop.permute.xlu0 %500
        %504 = vset.pattern.permute.xlu0 0
        %505 = vperm.xlu0 %504, %v426
        %v506 = vpop.permute.xlu0 %505
        %v508 = vlaneseq
        %v509 = vshrl.u32 %v508, 7
        %v510 = vsub.s32 0, %v509
        %v511 = vrot.slane %v427, %v510
        %v512 = vmul.f32 %v431, %v511
        %v513 = vmul.f32 %v436, %v511
        %v514 = vmul.f32 %v441, %v511
        %v515 = vmul.f32 %v446, %v511
        %v516 = vmul.f32 %v451, %v511
        %v517 = vmul.f32 %v456, %v511
        %v518 = vmul.f32 %v461, %v511
        %v519 = vmul.f32 %v466, %v511
        %v520 = vmul.f32 %v471, %v511
        %v521 = vmul.f32 %v476, %v511
        %v522 = vmul.f32 %v481, %v511
        %v523 = vmul.f32 %v486, %v511
        %v524 = vmul.f32 %v491, %v511
        %v525 = vmul.f32 %v496, %v511
        %v526 = vmul.f32 %v501, %v511
        %v527 = vmul.f32 %v506, %v511
        %v528 = vld [vmem:[%s1 + $0x1] sm:$0x1]
        %529 = vset.pattern.permute.xlu0 1
        %530 = vperm.xlu0 %529, %v411
        %v531 = vpop.permute.xlu0 %530
        %533 = vset.pattern.permute.xlu0 1
        %534 = vperm.xlu0 %533, %v412
        %v535 = vpop.permute.xlu0 %534
        %537 = vset.pattern.permute.xlu0 1
        %538 = vperm.xlu0 %537, %v413
        %v539 = vpop.permute.xlu0 %538
        %541 = vset.pattern.permute.xlu0 1
        %542 = vperm.xlu0 %541, %v414
        %v543 = vpop.permute.xlu0 %542
        %545 = vset.pattern.permute.xlu0 1
        %546 = vperm.xlu0 %545, %v415
        %v547 = vpop.permute.xlu0 %546
        %549 = vset.pattern.permute.xlu0 1
        %550 = vperm.xlu0 %549, %v416
        %v551 = vpop.permute.xlu0 %550
        %553 = vset.pattern.permute.xlu0 1
        %554 = vperm.xlu0 %553, %v417
        %v555 = vpop.permute.xlu0 %554
        %557 = vset.pattern.permute.xlu0 1
        %558 = vperm.xlu0 %557, %v418
        %v559 = vpop.permute.xlu0 %558
        %561 = vset.pattern.permute.xlu0 1
        %562 = vperm.xlu0 %561, %v419
        %v563 = vpop.permute.xlu0 %562
        %565 = vset.pattern.permute.xlu0 1
        %566 = vperm.xlu0 %565, %v420
        %v567 = vpop.permute.xlu0 %566
        %569 = vset.pattern.permute.xlu0 1
        %570 = vperm.xlu0 %569, %v421
        %v571 = vpop.permute.xlu0 %570
        %573 = vset.pattern.permute.xlu0 1
        %574 = vperm.xlu0 %573, %v422
        %v575 = vpop.permute.xlu0 %574
        %577 = vset.pattern.permute.xlu0 1
        %578 = vperm.xlu0 %577, %v423
        %v579 = vpop.permute.xlu0 %578
        %581 = vset.pattern.permute.xlu0 1
        %582 = vperm.xlu0 %581, %v424
        %v583 = vpop.permute.xlu0 %582
        %585 = vset.pattern.permute.xlu0 1
        %586 = vperm.xlu0 %585, %v425
        %v587 = vpop.permute.xlu0 %586
        %589 = vset.pattern.permute.xlu0 1
        %590 = vperm.xlu0 %589, %v426
        %v591 = vpop.permute.xlu0 %590
        %v593 = vlaneseq
        %v594 = vshrl.u32 %v593, 7
        %v595 = vsub.s32 0, %v594
        %v596 = vrot.slane %v528, %v595
        %v597 = vmul.f32 %v531, %v596
        %v598 = vmul.f32 %v535, %v596
        %v599 = vmul.f32 %v539, %v596
        %v600 = vmul.f32 %v543, %v596
        %v601 = vmul.f32 %v547, %v596
        %v602 = vmul.f32 %v551, %v596
        %v603 = vmul.f32 %v555, %v596
        %v604 = vmul.f32 %v559, %v596
        %v605 = vmul.f32 %v563, %v596
        %v606 = vmul.f32 %v567, %v596
        %v607 = vmul.f32 %v571, %v596
        %v608 = vmul.f32 %v575, %v596
        %v609 = vmul.f32 %v579, %v596
        %v610 = vmul.f32 %v583, %v596
        %v611 = vmul.f32 %v587, %v596
        %v612 = vmul.f32 %v591, %v596
        %v613 = vadd.f32 %v512, %v597
        %v614 = vadd.f32 %v513, %v598
        %v615 = vadd.f32 %v514, %v599
        %v616 = vadd.f32 %v515, %v600
        %v617 = vadd.f32 %v516, %v601
        %v618 = vadd.f32 %v517, %v602
        %v619 = vadd.f32 %v518, %v603
        %v620 = vadd.f32 %v519, %v604
        %v621 = vadd.f32 %v520, %v605
        %v622 = vadd.f32 %v521, %v606
        %v623 = vadd.f32 %v522, %v607
        %v624 = vadd.f32 %v523, %v608
        %v625 = vadd.f32 %v524, %v609
        %v626 = vadd.f32 %v525, %v610
        %v627 = vadd.f32 %v526, %v611
        %v628 = vadd.f32 %v527, %v612
        %v629 = vld [vmem:[%s1 + $0x2] sm:$0x1]
        %630 = vset.pattern.permute.xlu0 2
        %631 = vperm.xlu0 %630, %v411
        %v632 = vpop.permute.xlu0 %631
        %634 = vset.pattern.permute.xlu0 2
        %635 = vperm.xlu0 %634, %v412
        %v636 = vpop.permute.xlu0 %635
        %638 = vset.pattern.permute.xlu0 2
        %639 = vperm.xlu0 %638, %v413
        %v640 = vpop.permute.xlu0 %639
        %642 = vset.pattern.permute.xlu0 2
        %643 = vperm.xlu0 %642, %v414
        %v644 = vpop.permute.xlu0 %643
        %646 = vset.pattern.permute.xlu0 2
        %647 = vperm.xlu0 %646, %v415
        %v648 = vpop.permute.xlu0 %647
        %650 = vset.pattern.permute.xlu0 2
        %651 = vperm.xlu0 %650, %v416
        %v652 = vpop.permute.xlu0 %651
        %654 = vset.pattern.permute.xlu0 2
        %655 = vperm.xlu0 %654, %v417
        %v656 = vpop.permute.xlu0 %655
        %658 = vset.pattern.permute.xlu0 2
        %659 = vperm.xlu0 %658, %v418
        %v660 = vpop.permute.xlu0 %659
        %662 = vset.pattern.permute.xlu0 2
        %663 = vperm.xlu0 %662, %v419
        %v664 = vpop.permute.xlu0 %663
        %666 = vset.pattern.permute.xlu0 2
        %667 = vperm.xlu0 %666, %v420
        %v668 = vpop.permute.xlu0 %667
        %670 = vset.pattern.permute.xlu0 2
        %671 = vperm.xlu0 %670, %v421
        %v672 = vpop.permute.xlu0 %671
        %674 = vset.pattern.permute.xlu0 2
        %675 = vperm.xlu0 %674, %v422
        %v676 = vpop.permute.xlu0 %675
        %678 = vset.pattern.permute.xlu0 2
        %679 = vperm.xlu0 %678, %v423
        %v680 = vpop.permute.xlu0 %679
        %682 = vset.pattern.permute.xlu0 2
        %683 = vperm.xlu0 %682, %v424
        %v684 = vpop.permute.xlu0 %683
        %686 = vset.pattern.permute.xlu0 2
        %687 = vperm.xlu0 %686, %v425
        %v688 = vpop.permute.xlu0 %687
        %690 = vset.pattern.permute.xlu0 2
        %691 = vperm.xlu0 %690, %v426
        %v692 = vpop.permute.xlu0 %691
        %v694 = vlaneseq
        %v695 = vshrl.u32 %v694, 7
        %v696 = vsub.s32 0, %v695
        %v697 = vrot.slane %v629, %v696
        %v698 = vmul.f32 %v632, %v697
        %v699 = vmul.f32 %v636, %v697
        %v700 = vmul.f32 %v640, %v697
        %v701 = vmul.f32 %v644, %v697
        %v702 = vmul.f32 %v648, %v697
        %v703 = vmul.f32 %v652, %v697
        %v704 = vmul.f32 %v656, %v697
        %v705 = vmul.f32 %v660, %v697
        %v706 = vmul.f32 %v664, %v697
        %v707 = vmul.f32 %v668, %v697
        %v708 = vmul.f32 %v672, %v697
        %v709 = vmul.f32 %v676, %v697
        %v710 = vmul.f32 %v680, %v697
        %v711 = vmul.f32 %v684, %v697
        %v712 = vmul.f32 %v688, %v697
        %v713 = vmul.f32 %v692, %v697
        %v714 = vadd.f32 %v613, %v698
        %v715 = vadd.f32 %v614, %v699
        %v716 = vadd.f32 %v615, %v700
        %v717 = vadd.f32 %v616, %v701
        %v718 = vadd.f32 %v617, %v702
        %v719 = vadd.f32 %v618, %v703
        %v720 = vadd.f32 %v619, %v704
        %v721 = vadd.f32 %v620, %v705
        %v722 = vadd.f32 %v621, %v706
        %v723 = vadd.f32 %v622, %v707
        %v724 = vadd.f32 %v623, %v708
        %v725 = vadd.f32 %v624, %v709
        %v726 = vadd.f32 %v625, %v710
        %v727 = vadd.f32 %v626, %v711
        %v728 = vadd.f32 %v627, %v712
        %v729 = vadd.f32 %v628, %v713
        %v730 = vld [vmem:[%s2] sm:$0x1]
        %v732 = vlaneseq
        %v733 = vshrl.u32 %v732, 7
        %v734 = vsub.s32 0, %v733
        %v735 = vrot.slane %v730, %v734
        %v737 = vadd.f32 %v714, %v735
        %v738 = vadd.f32 %v715, %v735
        %v739 = vadd.f32 %v716, %v735
        %v740 = vadd.f32 %v717, %v735
        %v741 = vadd.f32 %v718, %v735
        %v742 = vadd.f32 %v719, %v735
        %v743 = vadd.f32 %v720, %v735
        %v744 = vadd.f32 %v721, %v735
        %v745 = vadd.f32 %v722, %v735
        %v746 = vadd.f32 %v723, %v735
        %v747 = vadd.f32 %v724, %v735
        %v748 = vadd.f32 %v725, %v735
        %v749 = vadd.f32 %v726, %v735
        %v750 = vadd.f32 %v727, %v735
        %v751 = vadd.f32 %v728, %v735
        %v752 = vadd.f32 %v729, %v735
        %v753 = vmax.f32 %v737, 0.0
        %v754 = vmax.f32 %v738, 0.0
        %v755 = vmax.f32 %v739, 0.0
        %v756 = vmax.f32 %v740, 0.0
        %v757 = vmax.f32 %v741, 0.0
        %v758 = vmax.f32 %v742, 0.0
        %v759 = vmax.f32 %v743, 0.0
        %v760 = vmax.f32 %v744, 0.0
        %v761 = vmax.f32 %v745, 0.0
        %v762 = vmax.f32 %v746, 0.0
        %v763 = vmax.f32 %v747, 0.0
        %v764 = vmax.f32 %v748, 0.0
        %v765 = vmax.f32 %v749, 0.0
        %v766 = vmax.f32 %v750, 0.0
        %v767 = vmax.f32 %v751, 0.0
        %v768 = vmax.f32 %v752, 0.0
        %v769 = vld [vmem:[%s3] sm:$0xff]
        %v770 = vld [vmem:[%s3 + $0x8] sm:$0xff]
        %v771 = vld [vmem:[%s3 + $0x10] sm:$0xff]
        %v772 = vld [vmem:[%s3 + $0x18] sm:$0xff]
        %v773 = vld [vmem:[%s3 + $0x20] sm:$0xff]
        %v774 = vld [vmem:[%s3 + $0x28] sm:$0xff]
        %v775 = vld [vmem:[%s3 + $0x30] sm:$0xff]
        %v776 = vld [vmem:[%s3 + $0x38] sm:$0xff]
        %v777 = vld [vmem:[%s4] sm:$0x1]
        %v779 = vlaneseq
        %v780 = vshrl.u32 %v779, 7
        %v781 = vsub.s32 0, %v780
        %v782 = vrot.slane %v777, %v781
        %vm784 = vcmask 523264
        %v786 = vsel %vm784, %v753, 0
        %v789 = vsel %vm784, %v754, 0
        %v792 = vsel %vm784, %v755, 0
        %v795 = vsel %vm784, %v756, 0
        %v798 = vsel %vm784, %v757, 0
        %v801 = vsel %vm784, %v758, 0
        %v804 = vsel %vm784, %v759, 0
        %v807 = vsel %vm784, %v760, 0
        %v810 = vsel %vm784, %v761, 0
        %v813 = vsel %vm784, %v762, 0
        %v816 = vsel %vm784, %v763, 0
        %v819 = vsel %vm784, %v764, 0
        %v822 = vsel %vm784, %v765, 0
        %v825 = vsel %vm784, %v766, 0
        %v828 = vsel %vm784, %v767, 0
        %v831 = vsel %vm784, %v768, 0
        %833 = vmatprep.subr.mxu0 0.0
        %834 = vmatpush1.msra.mxu0 %v769
        %835 = vmatprep.subr.mxu0 0.0
        %836 = vmatpush1.msra.mxu0 %v770
        %837 = vmatprep.subr.mxu0 0.0
        %838 = vmatpush1.msra.mxu0 %v771
        %839 = vmatprep.subr.mxu0 0.0
        %840 = vmatpush1.msra.mxu0 %v772
        %841 = vmatprep.subr.mxu0 0.0
        %842 = vmatpush1.msra.mxu0 %v773
        %843 = vmatprep.subr.mxu0 0.0
        %844 = vmatpush1.msra.mxu0 %v774
        %845 = vmatprep.subr.mxu0 0.0
        %846 = vmatpush1.msra.mxu0 %v775
        %847 = vmatprep.subr.mxu0 0.0
        %848 = vmatpush1.msra.mxu0 %v776
        %849 = vmatprep.subr.mxu0 0.0
        %850 = vmatpush1.msra.mxu0 0.0
        %851 = vmatprep.subr.mxu0 0.0
        %852 = vmatpush1.msra.mxu0 0.0
        %853 = vmatprep.subr.mxu0 0.0
        %854 = vmatpush1.msra.mxu0 0.0
        %855 = vmatprep.subr.mxu0 0.0
        %856 = vmatpush1.msra.mxu0 0.0
        %857 = vmatprep.subr.mxu0 0.0
        %858 = vmatpush1.msra.mxu0 0.0
        %859 = vmatprep.subr.mxu0 0.0
        %860 = vmatpush1.msra.mxu0 0.0
        %861 = vmatprep.subr.mxu0 0.0
        %862 = vmatpush1.msra.mxu0 0.0
        %863 = vmatprep.subr.mxu0 0.0
        %864 = vmatpush1.msra.mxu0 0.0
        %865 = vmatprep.subr.mxu0 0.0
        %866 = vmatpush1.msra.mxu0 0.0
        %867 = vmatprep.subr.mxu0 0.0
        %868 = vmatpush1.msra.mxu0 0.0
        %869 = vmatprep.subr.mxu0 0.0
        %870 = vmatpush1.msra.mxu0 0.0
        %871 = vmatprep.subr.mxu0 0.0
        %872 = vmatpush1.msra.mxu0 0.0
        %873 = vmatprep.subr.mxu0 0.0
        %874 = vmatpush1.msra.mxu0 0.0
        %875 = vmatprep.subr.mxu0 0.0
        %876 = vmatpush1.msra.mxu0 0.0
        %877 = vmatprep.subr.mxu0 0.0
        %878 = vmatpush1.msra.mxu0 0.0
        %879 = vmatprep.subr.mxu0 0.0
        %880 = vmatpush1.msra.mxu0 0.0
        %881 = vmatprep.subr.mxu0 0.0
        %882 = vmatpush1.msra.mxu0 0.0
        %883 = vmatprep.subr.mxu0 0.0
        %884 = vmatpush1.msra.mxu0 0.0
        %885 = vmatprep.subr.mxu0 0.0
        %886 = vmatpush1.msra.mxu0 0.0
        %887 = vmatprep.subr.mxu0 0.0
        %888 = vmatpush1.msra.mxu0 0.0
        %889 = vmatprep.subr.mxu0 0.0
        %890 = vmatpush1.msra.mxu0 0.0
        %891 = vmatprep.subr.mxu0 0.0
        %892 = vmatpush1.msra.mxu0 0.0
        %893 = vmatprep.subr.mxu0 0.0
        %894 = vmatpush1.msra.mxu0 0.0
        %895 = vmatprep.subr.mxu0 0.0
        %896 = vmatpush1.msra.mxu0 0.0
        %897 = vmatprep.mubr.f32.mxu0 0.0
        %898 = vmatmul.mubr.f32.gmra.mrb[0].mxu0 %v786
        %v899 = vpop.f32.mrb[0].mxu0
        %v900 = vadd.f32 %v782, %v899
        %v901 = vpop.f32.mrb[0].mxu0
        %902 = vmatprep.mubr.f32.mxu0 0.0
        %903 = vmatmul.mubr.f32.gmra.mrb[0].mxu0 %v789
        %v904 = vpop.f32.mrb[0].mxu0
        %v905 = vadd.f32 %v782, %v904
        %v906 = vpop.f32.mrb[0].mxu0
        %907 = vmatprep.mubr.f32.mxu0 0.0
        %908 = vmatmul.mubr.f32.gmra.mrb[0].mxu0 %v792
        %v909 = vpop.f32.mrb[0].mxu0
        %v910 = vadd.f32 %v782, %v909
        %v911 = vpop.f32.mrb[0].mxu0
        %912 = vmatprep.mubr.f32.mxu0 0.0
        %913 = vmatmul.mubr.f32.gmra.mrb[0].mxu0 %v795
        %v914 = vpop.f32.mrb[0].mxu0
        %v915 = vadd.f32 %v782, %v914
        %v916 = vpop.f32.mrb[0].mxu0
        %917 = vmatprep.mubr.f32.mxu0 0.0
        %918 = vmatmul.mubr.f32.gmra.mrb[0].mxu0 %v798
        %v919 = vpop.f32.mrb[0].mxu0
        %v920 = vadd.f32 %v782, %v919
        %v921 = vpop.f32.mrb[0].mxu0
        %922 = vmatprep.mubr.f32.mxu0 0.0
        %923 = vmatmul.mubr.f32.gmra.mrb[0].mxu0 %v801
        %v924 = vpop.f32.mrb[0].mxu0
        %v925 = vadd.f32 %v782, %v924
        %v926 = vpop.f32.mrb[0].mxu0
        %927 = vmatprep.mubr.f32.mxu0 0.0
        %928 = vmatmul.mubr.f32.gmra.mrb[0].mxu0 %v804
        %v929 = vpop.f32.mrb[0].mxu0
        %v930 = vadd.f32 %v782, %v929
        %v931 = vpop.f32.mrb[0].mxu0
        %932 = vmatprep.mubr.f32.mxu0 0.0
        %933 = vmatmul.mubr.f32.gmra.mrb[0].mxu0 %v807
        %v934 = vpop.f32.mrb[0].mxu0
        %v935 = vadd.f32 %v782, %v934
        %v936 = vpop.f32.mrb[0].mxu0
        %937 = vmatprep.mubr.f32.mxu0 0.0
        %938 = vmatmul.mubr.f32.gmra.mrb[0].mxu0 %v810
        %v939 = vpop.f32.mrb[0].mxu0
        %v940 = vadd.f32 %v782, %v939
        %v941 = vpop.f32.mrb[0].mxu0
        %942 = vmatprep.mubr.f32.mxu0 0.0
        %943 = vmatmul.mubr.f32.gmra.mrb[0].mxu0 %v813
        %v944 = vpop.f32.mrb[0].mxu0
        %v945 = vadd.f32 %v782, %v944
        %v946 = vpop.f32.mrb[0].mxu0
        %947 = vmatprep.mubr.f32.mxu0 0.0
        %948 = vmatmul.mubr.f32.gmra.mrb[0].mxu0 %v816
        %v949 = vpop.f32.mrb[0].mxu0
        %v950 = vadd.f32 %v782, %v949
        %v951 = vpop.f32.mrb[0].mxu0
        %952 = vmatprep.mubr.f32.mxu0 0.0
        %953 = vmatmul.mubr.f32.gmra.mrb[0].mxu0 %v819
        %v954 = vpop.f32.mrb[0].mxu0
        %v955 = vadd.f32 %v782, %v954
        %v956 = vpop.f32.mrb[0].mxu0
        %957 = vmatprep.mubr.f32.mxu0 0.0
        %958 = vmatmul.mubr.f32.gmra.mrb[0].mxu0 %v822
        %v959 = vpop.f32.mrb[0].mxu0
        %v960 = vadd.f32 %v782, %v959
        %v961 = vpop.f32.mrb[0].mxu0
        %962 = vmatprep.mubr.f32.mxu0 0.0
        %963 = vmatmul.mubr.f32.gmra.mrb[0].mxu0 %v825
        %v964 = vpop.f32.mrb[0].mxu0
        %v965 = vadd.f32 %v782, %v964
        %v966 = vpop.f32.mrb[0].mxu0
        %967 = vmatprep.mubr.f32.mxu0 0.0
        %968 = vmatmul.mubr.f32.gmra.mrb[0].mxu0 %v828
        %v969 = vpop.f32.mrb[0].mxu0
        %v970 = vadd.f32 %v782, %v969
        %v971 = vpop.f32.mrb[0].mxu0
        %972 = vmatprep.mubr.f32.mxu0 0.0
        %973 = vmatmul.mubr.f32.gmra.mrb[0].mxu0 %v831
        %v974 = vpop.f32.mrb[0].mxu0
        %v975 = vadd.f32 %v782, %v974
        %v976 = vpop.f32.mrb[0].mxu0
        %977 = vdwg.mxu0
        %vm978 = vcmask 261120
        %v979 = vsel %vm978, %v900, -inf
        %v980 = vsel %vm978, %v905, -inf
        %v981 = vsel %vm978, %v910, -inf
        %v982 = vsel %vm978, %v915, -inf
        %v983 = vsel %vm978, %v920, -inf
        %v984 = vmax.f32 %v979, %v983
        %v985 = vsel %vm978, %v925, -inf
        %v986 = vmax.f32 %v980, %v985
        %v987 = vsel %vm978, %v930, -inf
        %v988 = vmax.f32 %v981, %v987
        %v989 = vsel %vm978, %v935, -inf
        %v990 = vmax.f32 %v982, %v989
        %v991 = vsel %vm978, %v940, -inf
        %v992 = vmax.f32 %v984, %v991
        %v993 = vsel %vm978, %v945, -inf
        %v994 = vmax.f32 %v986, %v993
        %v995 = vsel %vm978, %v950, -inf
        %v996 = vmax.f32 %v988, %v995
        %v997 = vsel %vm978, %v955, -inf
        %v998 = vmax.f32 %v990, %v997
        %v999 = vsel %vm978, %v960, -inf
        %v1000 = vmax.f32 %v992, %v999
        %v1001 = vsel %vm978, %v965, -inf
        %v1002 = vmax.f32 %v994, %v1001
        %v1003 = vsel %vm978, %v970, -inf
        %v1004 = vmax.f32 %v996, %v1003
        %v1005 = vsel %vm978, %v975, -inf
        %v1006 = vmax.f32 %v998, %v1005
        %v1007 = vmax.f32 %v1000, %v1002
        %v1008 = vmax.f32 %v1004, %v1006
        %v1009 = vmax.f32 %v1007, %v1008
        %v1010 = vrot.slane %v1009, 4
        %v1011 = vmax.f32 %v1009, %v1010
        %v1012 = vrot.slane %v1011, 2
        %v1013 = vmax.f32 %v1011, %v1012
        %v1014 = vrot.slane %v1013, 1
        %v1015 = vmax.f32 %v1013, %v1014
        %v1016 = vmax.f32 %v900, 0.0
        %v1017 = vmax.f32 %v905, 0.0
        %v1018 = vmax.f32 %v910, 0.0
        %v1019 = vmax.f32 %v915, 0.0
        %v1020 = vmax.f32 %v920, 0.0
        %v1021 = vmax.f32 %v925, 0.0
        %v1022 = vmax.f32 %v930, 0.0
        %v1023 = vmax.f32 %v935, 0.0
        %v1024 = vmax.f32 %v940, 0.0
        %v1025 = vmax.f32 %v945, 0.0
        %v1026 = vmax.f32 %v950, 0.0
        %v1027 = vmax.f32 %v955, 0.0
        %v1028 = vmax.f32 %v960, 0.0
        %v1029 = vmax.f32 %v965, 0.0
        %v1030 = vmax.f32 %v970, 0.0
        %v1031 = vmax.f32 %v975, 0.0
        %v1032 = vmax.f32 %v1015, 0.0
        %v1033 = vld [vmem:[%s5] sm:$0xff]
        %v1034 = vld [vmem:[%s5 + $0x8] sm:$0xff]
        %v1035 = vld [vmem:[%s5 + $0x10] sm:$0xff]
        %v1036 = vld [vmem:[%s5 + $0x18] sm:$0xff]
        %v1037 = vld [vmem:[%s6] sm:$0xff]
        %v1038 = vld [vmem:[%s6 + $0x8] sm:$0xff]
        %v1039 = vld [vmem:[%s6 + $0x10] sm:$0xff]
        %v1040 = vld [vmem:[%s6 + $0x18] sm:$0xff]
        %v1042 = vsel %vm978, %v1032, 0
        %1044 = vmatprep.subr.mxu0 0.0
        %1045 = vmatpush1.msra.mxu0 %v1037
        %1046 = vmatprep.subr.mxu0 0.0
        %1047 = vmatpush1.msra.mxu0 %v1038
        %1048 = vmatprep.subr.mxu0 0.0
        %1049 = vmatpush1.msra.mxu0 %v1039
        %1050 = vmatprep.subr.mxu0 0.0
        %1051 = vmatpush1.msra.mxu0 %v1040
        %1052 = vmatprep.subr.mxu0 0.0
        %1053 = vmatpush1.msra.mxu0 0.0
        %1054 = vmatprep.subr.mxu0 0.0
        %1055 = vmatpush1.msra.mxu0 0.0
        %1056 = vmatprep.subr.mxu0 0.0
        %1057 = vmatpush1.msra.mxu0 0.0
        %1058 = vmatprep.subr.mxu0 0.0
        %1059 = vmatpush1.msra.mxu0 0.0
        %1060 = vmatprep.subr.mxu0 0.0
        %1061 = vmatpush1.msra.mxu0 0.0
        %1062 = vmatprep.subr.mxu0 0.0
        %1063 = vmatpush1.msra.mxu0 0.0
        %1064 = vmatprep.subr.mxu0 0.0
        %1065 = vmatpush1.msra.mxu0 0.0
        %1066 = vmatprep.subr.mxu0 0.0
        %1067 = vmatpush1.msra.mxu0 0.0
        %1068 = vmatprep.subr.mxu0 0.0
        %1069 = vmatpush1.msra.mxu0 0.0
        %1070 = vmatprep.subr.mxu0 0.0
        %1071 = vmatpush1.msra.mxu0 0.0
        %1072 = vmatprep.subr.mxu0 0.0
        %1073 = vmatpush1.msra.mxu0 0.0
        %1074 = vmatprep.subr.mxu0 0.0
        %1075 = vmatpush1.msra.mxu0 0.0
        %1076 = vmatprep.subr.mxu0 0.0
        %1077 = vmatpush1.msra.mxu0 0.0
        %1078 = vmatprep.subr.mxu0 0.0
        %1079 = vmatpush1.msra.mxu0 0.0
        %1080 = vmatprep.subr.mxu0 0.0
        %1081 = vmatpush1.msra.mxu0 0.0
        %1082 = vmatprep.subr.mxu0 0.0
        %1083 = vmatpush1.msra.mxu0 0.0
        %1084 = vmatprep.subr.mxu0 0.0
        %1085 = vmatpush1.msra.mxu0 0.0
        %1086 = vmatprep.subr.mxu0 0.0
        %1087 = vmatpush1.msra.mxu0 0.0
        %1088 = vmatprep.subr.mxu0 0.0
        %1089 = vmatpush1.msra.mxu0 0.0
        %1090 = vmatprep.subr.mxu0 0.0
        %1091 = vmatpush1.msra.mxu0 0.0
        %1092 = vmatprep.subr.mxu0 0.0
        %1093 = vmatpush1.msra.mxu0 0.0
        %1094 = vmatprep.subr.mxu0 0.0
        %1095 = vmatpush1.msra.mxu0 0.0
        %1096 = vmatprep.subr.mxu0 0.0
        %1097 = vmatpush1.msra.mxu0 0.0
        %1098 = vmatprep.subr.mxu0 0.0
        %1099 = vmatpush1.msra.mxu0 0.0
        %1100 = vmatprep.subr.mxu0 0.0
        %1101 = vmatpush1.msra.mxu0 0.0
        %1102 = vmatprep.subr.mxu0 0.0
        %1103 = vmatpush1.msra.mxu0 0.0
        %1104 = vmatprep.subr.mxu0 0.0
        %1105 = vmatpush1.msra.mxu0 0.0
        %1106 = vmatprep.subr.mxu0 0.0
        %1107 = vmatpush1.msra.mxu0 0.0
        %1108 = vmatprep.mubr.f32.mxu0 0.0
        %1109 = vmatmul.mubr.f32.gmra.mrb[0].mxu0 %v1042
        %v1110 = vpop.f32.mrb[0].mxu0
        %v1111 = vadd.f32 0.0, %v1110
        %v1112 = vpop.f32.mrb[0].mxu0
        %1113 = vdwg.mxu0
        %v1114 = vlaneseq
        %v1115 = vshrl.u32 %v1114, 7
        %v1116 = vsub.s32 0, %v1115
        %v1117 = vrot.slane %v1111, %v1116
        %v1119 = vsel %vm978, %v1016, 0
        %v1122 = vsel %vm978, %v1017, 0
        %v1125 = vsel %vm978, %v1018, 0
        %v1128 = vsel %vm978, %v1019, 0
        %v1131 = vsel %vm978, %v1020, 0
        %v1134 = vsel %vm978, %v1021, 0
        %v1137 = vsel %vm978, %v1022, 0
        %v1140 = vsel %vm978, %v1023, 0
        %v1143 = vsel %vm978, %v1024, 0
        %v1146 = vsel %vm978, %v1025, 0
        %v1149 = vsel %vm978, %v1026, 0
        %v1152 = vsel %vm978, %v1027, 0
        %v1155 = vsel %vm978, %v1028, 0
        %v1158 = vsel %vm978, %v1029, 0
        %v1161 = vsel %vm978, %v1030, 0
        %v1164 = vsel %vm978, %v1031, 0
        %1166 = vmatprep.subr.mxu0 0.0
        %1167 = vmatpush1.msra.mxu0 %v1033
        %1168 = vmatprep.subr.mxu0 0.0
        %1169 = vmatpush1.msra.mxu0 %v1034
        %1170 = vmatprep.subr.mxu0 0.0
        %1171 = vmatpush1.msra.mxu0 %v1035
        %1172 = vmatprep.subr.mxu0 0.0
        %1173 = vmatpush1.msra.mxu0 %v1036
        %1174 = vmatprep.subr.mxu0 0.0
        %1175 = vmatpush1.msra.mxu0 0.0
        %1176 = vmatprep.subr.mxu0 0.0
        %1177 = vmatpush1.msra.mxu0 0.0
        %1178 = vmatprep.subr.mxu0 0.0
        %1179 = vmatpush1.msra.mxu0 0.0
        %1180 = vmatprep.subr.mxu0 0.0
        %1181 = vmatpush1.msra.mxu0 0.0
        %1182 = vmatprep.subr.mxu0 0.0
        %1183 = vmatpush1.msra.mxu0 0.0
        %1184 = vmatprep.subr.mxu0 0.0
        %1185 = vmatpush1.msra.mxu0 0.0
        %1186 = vmatprep.subr.mxu0 0.0
        %1187 = vmatpush1.msra.mxu0 0.0
        %1188 = vmatprep.subr.mxu0 0.0
        %1189 = vmatpush1.msra.mxu0 0.0
        %1190 = vmatprep.subr.mxu0 0.0
        %1191 = vmatpush1.msra.mxu0 0.0
        %1192 = vmatprep.subr.mxu0 0.0
        %1193 = vmatpush1.msra.mxu0 0.0
        %1194 = vmatprep.subr.mxu0 0.0
        %1195 = vmatpush1.msra.mxu0 0.0
        %1196 = vmatprep.subr.mxu0 0.0
        %1197 = vmatpush1.msra.mxu0 0.0
        %1198 = vmatprep.subr.mxu0 0.0
        %1199 = vmatpush1.msra.mxu0 0.0
        %1200 = vmatprep.subr.mxu0 0.0
        %1201 = vmatpush1.msra.mxu0 0.0
        %1202 = vmatprep.subr.mxu0 0.0
        %1203 = vmatpush1.msra.mxu0 0.0
        %1204 = vmatprep.subr.mxu0 0.0
        %1205 = vmatpush1.msra.mxu0 0.0
        %1206 = vmatprep.subr.mxu0 0.0
        %1207 = vmatpush1.msra.mxu0 0.0
        %1208 = vmatprep.subr.mxu0 0.0
        %1209 = vmatpush1.msra.mxu0 0.0
        %1210 = vmatprep.subr.mxu0 0.0
        %1211 = vmatpush1.msra.mxu0 0.0
        %1212 = vmatprep.subr.mxu0 0.0
        %1213 = vmatpush1.msra.mxu0 0.0
        %1214 = vmatprep.subr.mxu0 0.0
        %1215 = vmatpush1.msra.mxu0 0.0
        %1216 = vmatprep.subr.mxu0 0.0
        %1217 = vmatpush1.msra.mxu0 0.0
        %1218 = vmatprep.subr.mxu0 0.0
        %1219 = vmatpush1.msra.mxu0 0.0
        %1220 = vmatprep.subr.mxu0 0.0
        %1221 = vmatpush1.msra.mxu0 0.0
        %1222 = vmatprep.subr.mxu0 0.0
        %1223 = vmatpush1.msra.mxu0 0.0
        %1224 = vmatprep.subr.mxu0 0.0
        %1225 = vmatpush1.msra.mxu0 0.0
        %1226 = vmatprep.subr.mxu0 0.0
        %1227 = vmatpush1.msra.mxu0 0.0
        %1228 = vmatprep.subr.mxu0 0.0
        %1229 = vmatpush1.msra.mxu0 0.0
        %1230 = vmatprep.mubr.f32.mxu0 0.0
        %1231 = vmatmul.mubr.f32.gmra.mrb[0].mxu0 %v1119
        %v1232 = vpop.f32.mrb[0].mxu0
        %v1233 = vadd.f32 %v1117, %v1232
        %v1234 = vpop.f32.mrb[0].mxu0
        %1235 = vmatprep.mubr.f32.mxu0 0.0
        %1236 = vmatmul.mubr.f32.gmra.mrb[0].mxu0 %v1122
        %v1237 = vpop.f32.mrb[0].mxu0
        %v1238 = vadd.f32 %v1117, %v1237
        %v1239 = vpop.f32.mrb[0].mxu0
        %1240 = vmatprep.mubr.f32.mxu0 0.0
        %1241 = vmatmul.mubr.f32.gmra.mrb[0].mxu0 %v1125
        %v1242 = vpop.f32.mrb[0].mxu0
        %v1243 = vadd.f32 %v1117, %v1242
        %v1244 = vpop.f32.mrb[0].mxu0
        %1245 = vmatprep.mubr.f32.mxu0 0.0
        %1246 = vmatmul.mubr.f32.gmra.mrb[0].mxu0 %v1128
        %v1247 = vpop.f32.mrb[0].mxu0
        %v1248 = vadd.f32 %v1117, %v1247
        %v1249 = vpop.f32.mrb[0].mxu0
        %1250 = vmatprep.mubr.f32.mxu0 0.0
        %1251 = vmatmul.mubr.f32.gmra.mrb[0].mxu0 %v1131
        %v1252 = vpop.f32.mrb[0].mxu0
        %v1253 = vadd.f32 %v1117, %v1252
        %v1254 = vpop.f32.mrb[0].mxu0
        %1255 = vmatprep.mubr.f32.mxu0 0.0
        %1256 = vmatmul.mubr.f32.gmra.mrb[0].mxu0 %v1134
        %v1257 = vpop.f32.mrb[0].mxu0
        %v1258 = vadd.f32 %v1117, %v1257
        %v1259 = vpop.f32.mrb[0].mxu0
        %1260 = vmatprep.mubr.f32.mxu0 0.0
        %1261 = vmatmul.mubr.f32.gmra.mrb[0].mxu0 %v1137
        %v1262 = vpop.f32.mrb[0].mxu0
        %v1263 = vadd.f32 %v1117, %v1262
        %v1264 = vpop.f32.mrb[0].mxu0
        %1265 = vmatprep.mubr.f32.mxu0 0.0
        %1266 = vmatmul.mubr.f32.gmra.mrb[0].mxu0 %v1140
        %v1267 = vpop.f32.mrb[0].mxu0
        %v1268 = vadd.f32 %v1117, %v1267
        %v1269 = vpop.f32.mrb[0].mxu0
        %1270 = vmatprep.mubr.f32.mxu0 0.0
        %1271 = vmatmul.mubr.f32.gmra.mrb[0].mxu0 %v1143
        %v1272 = vpop.f32.mrb[0].mxu0
        %v1273 = vadd.f32 %v1117, %v1272
        %v1274 = vpop.f32.mrb[0].mxu0
        %1275 = vmatprep.mubr.f32.mxu0 0.0
        %1276 = vmatmul.mubr.f32.gmra.mrb[0].mxu0 %v1146
        %v1277 = vpop.f32.mrb[0].mxu0
        %v1278 = vadd.f32 %v1117, %v1277
        %v1279 = vpop.f32.mrb[0].mxu0
        %1280 = vmatprep.mubr.f32.mxu0 0.0
        %1281 = vmatmul.mubr.f32.gmra.mrb[0].mxu0 %v1149
        %v1282 = vpop.f32.mrb[0].mxu0
        %v1283 = vadd.f32 %v1117, %v1282
        %v1284 = vpop.f32.mrb[0].mxu0
        %1285 = vmatprep.mubr.f32.mxu0 0.0
        %1286 = vmatmul.mubr.f32.gmra.mrb[0].mxu0 %v1152
        %v1287 = vpop.f32.mrb[0].mxu0
        %v1288 = vadd.f32 %v1117, %v1287
        %v1289 = vpop.f32.mrb[0].mxu0
        %1290 = vmatprep.mubr.f32.mxu0 0.0
        %1291 = vmatmul.mubr.f32.gmra.mrb[0].mxu0 %v1155
        %v1292 = vpop.f32.mrb[0].mxu0
        %v1293 = vadd.f32 %v1117, %v1292
        %v1294 = vpop.f32.mrb[0].mxu0
        %1295 = vmatprep.mubr.f32.mxu0 0.0
        %1296 = vmatmul.mubr.f32.gmra.mrb[0].mxu0 %v1158
        %v1297 = vpop.f32.mrb[0].mxu0
        %v1298 = vadd.f32 %v1117, %v1297
        %v1299 = vpop.f32.mrb[0].mxu0
        %1300 = vmatprep.mubr.f32.mxu0 0.0
        %1301 = vmatmul.mubr.f32.gmra.mrb[0].mxu0 %v1161
        %v1302 = vpop.f32.mrb[0].mxu0
        %v1303 = vadd.f32 %v1117, %v1302
        %v1304 = vpop.f32.mrb[0].mxu0
        %1305 = vmatprep.mubr.f32.mxu0 0.0
        %1306 = vmatmul.mubr.f32.gmra.mrb[0].mxu0 %v1164
        %v1307 = vpop.f32.mrb[0].mxu0
        %v1308 = vadd.f32 %v1117, %v1307
        %v1309 = vpop.f32.mrb[0].mxu0
        %1310 = vdwg.mxu0
        %v1311 = vld [vmem:[%s7] sm:$0x1]
        %v1313 = vlaneseq
        %v1314 = vshrl.u32 %v1313, 7
        %v1315 = vsub.s32 0, %v1314
        %v1316 = vrot.slane %v1311, %v1315
        %v1318 = vadd.f32 %v1233, %v1316
        %v1319 = vadd.f32 %v1238, %v1316
        %v1320 = vadd.f32 %v1243, %v1316
        %v1321 = vadd.f32 %v1248, %v1316
        %v1322 = vadd.f32 %v1253, %v1316
        %v1323 = vadd.f32 %v1258, %v1316
        %v1324 = vadd.f32 %v1263, %v1316
        %v1325 = vadd.f32 %v1268, %v1316
        %v1326 = vadd.f32 %v1273, %v1316
        %v1327 = vadd.f32 %v1278, %v1316
        %v1328 = vadd.f32 %v1283, %v1316
        %v1329 = vadd.f32 %v1288, %v1316
        %v1330 = vadd.f32 %v1293, %v1316
        %v1331 = vadd.f32 %v1298, %v1316
        %v1332 = vadd.f32 %v1303, %v1316
        %v1333 = vadd.f32 %v1308, %v1316
        %v1334 = vsel %vm978, %v1318, -inf
        %v1335 = vsel %vm978, %v1319, -inf
        %v1336 = vsel %vm978, %v1320, -inf
        %v1337 = vsel %vm978, %v1321, -inf
        %v1338 = vsel %vm978, %v1322, -inf
        %v1339 = vmax.f32 %v1334, %v1338
        %v1340 = vsel %vm978, %v1323, -inf
        %v1341 = vmax.f32 %v1335, %v1340
        %v1342 = vsel %vm978, %v1324, -inf
        %v1343 = vmax.f32 %v1336, %v1342
        %v1344 = vsel %vm978, %v1325, -inf
        %v1345 = vmax.f32 %v1337, %v1344
        %v1346 = vsel %vm978, %v1326, -inf
        %v1347 = vmax.f32 %v1339, %v1346
        %v1348 = vsel %vm978, %v1327, -inf
        %v1349 = vmax.f32 %v1341, %v1348
        %v1350 = vsel %vm978, %v1328, -inf
        %v1351 = vmax.f32 %v1343, %v1350
        %v1352 = vsel %vm978, %v1329, -inf
        %v1353 = vmax.f32 %v1345, %v1352
        %v1354 = vsel %vm978, %v1330, -inf
        %v1355 = vmax.f32 %v1347, %v1354
        %v1356 = vsel %vm978, %v1331, -inf
        %v1357 = vmax.f32 %v1349, %v1356
        %v1358 = vsel %vm978, %v1332, -inf
        %v1359 = vmax.f32 %v1351, %v1358
        %v1360 = vsel %vm978, %v1333, -inf
        %v1361 = vmax.f32 %v1353, %v1360
        %v1362 = vmax.f32 %v1355, %v1357
        %v1363 = vmax.f32 %v1359, %v1361
        %v1364 = vmax.f32 %v1362, %v1363
        %v1365 = vrot.slane %v1364, 4
        %v1366 = vmax.f32 %v1364, %v1365
        %v1367 = vrot.slane %v1366, 2
        %v1368 = vmax.f32 %v1366, %v1367
        %v1369 = vrot.slane %v1368, 1
        %v1370 = vmax.f32 %v1368, %v1369
        %v1371 = vmax.f32 %v1318, 0.0
        %v1372 = vmax.f32 %v1319, 0.0
        %v1373 = vmax.f32 %v1320, 0.0
        %v1374 = vmax.f32 %v1321, 0.0
        %v1375 = vmax.f32 %v1322, 0.0
        %v1376 = vmax.f32 %v1323, 0.0
        %v1377 = vmax.f32 %v1324, 0.0
        %v1378 = vmax.f32 %v1325, 0.0
        %v1379 = vmax.f32 %v1326, 0.0
        %v1380 = vmax.f32 %v1327, 0.0
        %v1381 = vmax.f32 %v1328, 0.0
        %v1382 = vmax.f32 %v1329, 0.0
        %v1383 = vmax.f32 %v1330, 0.0
        %v1384 = vmax.f32 %v1331, 0.0
        %v1385 = vmax.f32 %v1332, 0.0
        %v1386 = vmax.f32 %v1333, 0.0
        %v1387 = vmax.f32 %v1370, 0.0
        %s1388 = scalar_lea.vmem %s5, 32
        %v1389 = vld [vmem:[%s1388] sm:$0xff]
        %v1390 = vld [vmem:[%s1388 + $0x8] sm:$0xff]
        %v1391 = vld [vmem:[%s1388 + $0x10] sm:$0xff]
        %v1392 = vld [vmem:[%s1388 + $0x18] sm:$0xff]
        %s1393 = scalar_lea.vmem %s6, 32
        %v1394 = vld [vmem:[%s1393] sm:$0xff]
        %v1395 = vld [vmem:[%s1393 + $0x8] sm:$0xff]
        %v1396 = vld [vmem:[%s1393 + $0x10] sm:$0xff]
        %v1397 = vld [vmem:[%s1393 + $0x18] sm:$0xff]
        %v1399 = vsel %vm978, %v1387, 0
        %1401 = vmatprep.subr.mxu0 0.0
        %1402 = vmatpush1.msra.mxu0 %v1394
        %1403 = vmatprep.subr.mxu0 0.0
        %1404 = vmatpush1.msra.mxu0 %v1395
        %1405 = vmatprep.subr.mxu0 0.0
        %1406 = vmatpush1.msra.mxu0 %v1396
        %1407 = vmatprep.subr.mxu0 0.0
        %1408 = vmatpush1.msra.mxu0 %v1397
        %1409 = vmatprep.subr.mxu0 0.0
        %1410 = vmatpush1.msra.mxu0 0.0
        %1411 = vmatprep.subr.mxu0 0.0
        %1412 = vmatpush1.msra.mxu0 0.0
        %1413 = vmatprep.subr.mxu0 0.0
        %1414 = vmatpush1.msra.mxu0 0.0
        %1415 = vmatprep.subr.mxu0 0.0
        %1416 = vmatpush1.msra.mxu0 0.0
        %1417 = vmatprep.subr.mxu0 0.0
        %1418 = vmatpush1.msra.mxu0 0.0
        %1419 = vmatprep.subr.mxu0 0.0
        %1420 = vmatpush1.msra.mxu0 0.0
        %1421 = vmatprep.subr.mxu0 0.0
        %1422 = vmatpush1.msra.mxu0 0.0
        %1423 = vmatprep.subr.mxu0 0.0
        %1424 = vmatpush1.msra.mxu0 0.0
        %1425 = vmatprep.subr.mxu0 0.0
        %1426 = vmatpush1.msra.mxu0 0.0
        %1427 = vmatprep.subr.mxu0 0.0
        %1428 = vmatpush1.msra.mxu0 0.0
        %1429 = vmatprep.subr.mxu0 0.0
        %1430 = vmatpush1.msra.mxu0 0.0
        %1431 = vmatprep.subr.mxu0 0.0
        %1432 = vmatpush1.msra.mxu0 0.0
        %1433 = vmatprep.subr.mxu0 0.0
        %1434 = vmatpush1.msra.mxu0 0.0
        %1435 = vmatprep.subr.mxu0 0.0
        %1436 = vmatpush1.msra.mxu0 0.0
        %1437 = vmatprep.subr.mxu0 0.0
        %1438 = vmatpush1.msra.mxu0 0.0
        %1439 = vmatprep.subr.mxu0 0.0
        %1440 = vmatpush1.msra.mxu0 0.0
        %1441 = vmatprep.subr.mxu0 0.0
        %1442 = vmatpush1.msra.mxu0 0.0
        %1443 = vmatprep.subr.mxu0 0.0
        %1444 = vmatpush1.msra.mxu0 0.0
        %1445 = vmatprep.subr.mxu0 0.0
        %1446 = vmatpush1.msra.mxu0 0.0
        %1447 = vmatprep.subr.mxu0 0.0
        %1448 = vmatpush1.msra.mxu0 0.0
        %1449 = vmatprep.subr.mxu0 0.0
        %1450 = vmatpush1.msra.mxu0 0.0
        %1451 = vmatprep.subr.mxu0 0.0
        %1452 = vmatpush1.msra.mxu0 0.0
        %1453 = vmatprep.subr.mxu0 0.0
        %1454 = vmatpush1.msra.mxu0 0.0
        %1455 = vmatprep.subr.mxu0 0.0
        %1456 = vmatpush1.msra.mxu0 0.0
        %1457 = vmatprep.subr.mxu0 0.0
        %1458 = vmatpush1.msra.mxu0 0.0
        %1459 = vmatprep.subr.mxu0 0.0
        %1460 = vmatpush1.msra.mxu0 0.0
        %1461 = vmatprep.subr.mxu0 0.0
        %1462 = vmatpush1.msra.mxu0 0.0
        %1463 = vmatprep.subr.mxu0 0.0
        %1464 = vmatpush1.msra.mxu0 0.0
        %1465 = vmatprep.mubr.f32.mxu0 0.0
        %1466 = vmatmul.mubr.f32.gmra.mrb[0].mxu0 %v1399
        %v1467 = vpop.f32.mrb[0].mxu0
        %v1468 = vadd.f32 0.0, %v1467
        %v1469 = vpop.f32.mrb[0].mxu0
        %1470 = vdwg.mxu0
        %v1471 = vlaneseq
        %v1472 = vshrl.u32 %v1471, 7
        %v1473 = vsub.s32 0, %v1472
        %v1474 = vrot.slane %v1468, %v1473
        %v1476 = vsel %vm978, %v1371, 0
        %v1479 = vsel %vm978, %v1372, 0
        %v1482 = vsel %vm978, %v1373, 0
        %v1485 = vsel %vm978, %v1374, 0
        %v1488 = vsel %vm978, %v1375, 0
        %v1491 = vsel %vm978, %v1376, 0
        %v1494 = vsel %vm978, %v1377, 0
        %v1497 = vsel %vm978, %v1378, 0
        %v1500 = vsel %vm978, %v1379, 0
        %v1503 = vsel %vm978, %v1380, 0
        %v1506 = vsel %vm978, %v1381, 0
        %v1509 = vsel %vm978, %v1382, 0
        %v1512 = vsel %vm978, %v1383, 0
        %v1515 = vsel %vm978, %v1384, 0
        %v1518 = vsel %vm978, %v1385, 0
        %v1521 = vsel %vm978, %v1386, 0
        %1523 = vmatprep.subr.mxu0 0.0
        %1524 = vmatpush1.msra.mxu0 %v1389
        %1525 = vmatprep.subr.mxu0 0.0
        %1526 = vmatpush1.msra.mxu0 %v1390
        %1527 = vmatprep.subr.mxu0 0.0
        %1528 = vmatpush1.msra.mxu0 %v1391
        %1529 = vmatprep.subr.mxu0 0.0
        %1530 = vmatpush1.msra.mxu0 %v1392
        %1531 = vmatprep.subr.mxu0 0.0
        %1532 = vmatpush1.msra.mxu0 0.0
        %1533 = vmatprep.subr.mxu0 0.0
        %1534 = vmatpush1.msra.mxu0 0.0
        %1535 = vmatprep.subr.mxu0 0.0
        %1536 = vmatpush1.msra.mxu0 0.0
        %1537 = vmatprep.subr.mxu0 0.0
        %1538 = vmatpush1.msra.mxu0 0.0
        %1539 = vmatprep.subr.mxu0 0.0
        %1540 = vmatpush1.msra.mxu0 0.0
        %1541 = vmatprep.subr.mxu0 0.0
        %1542 = vmatpush1.msra.mxu0 0.0
        %1543 = vmatprep.subr.mxu0 0.0
        %1544 = vmatpush1.msra.mxu0 0.0
        %1545 = vmatprep.subr.mxu0 0.0
        %1546 = vmatpush1.msra.mxu0 0.0
        %1547 = vmatprep.subr.mxu0 0.0
        %1548 = vmatpush1.msra.mxu0 0.0
        %1549 = vmatprep.subr.mxu0 0.0
        %1550 = vmatpush1.msra.mxu0 0.0
        %1551 = vmatprep.subr.mxu0 0.0
        %1552 = vmatpush1.msra.mxu0 0.0
        %1553 = vmatprep.subr.mxu0 0.0
        %1554 = vmatpush1.msra.mxu0 0.0
        %1555 = vmatprep.subr.mxu0 0.0
        %1556 = vmatpush1.msra.mxu0 0.0
        %1557 = vmatprep.subr.mxu0 0.0
        %1558 = vmatpush1.msra.mxu0 0.0
        %1559 = vmatprep.subr.mxu0 0.0
        %1560 = vmatpush1.msra.mxu0 0.0
        %1561 = vmatprep.subr.mxu0 0.0
        %1562 = vmatpush1.msra.mxu0 0.0
        %1563 = vmatprep.subr.mxu0 0.0
        %1564 = vmatpush1.msra.mxu0 0.0
        %1565 = vmatprep.subr.mxu0 0.0
        %1566 = vmatpush1.msra.mxu0 0.0
        %1567 = vmatprep.subr.mxu0 0.0
        %1568 = vmatpush1.msra.mxu0 0.0
        %1569 = vmatprep.subr.mxu0 0.0
        %1570 = vmatpush1.msra.mxu0 0.0
        %1571 = vmatprep.subr.mxu0 0.0
        %1572 = vmatpush1.msra.mxu0 0.0
        %1573 = vmatprep.subr.mxu0 0.0
        %1574 = vmatpush1.msra.mxu0 0.0
        %1575 = vmatprep.subr.mxu0 0.0
        %1576 = vmatpush1.msra.mxu0 0.0
        %1577 = vmatprep.subr.mxu0 0.0
        %1578 = vmatpush1.msra.mxu0 0.0
        %1579 = vmatprep.subr.mxu0 0.0
        %1580 = vmatpush1.msra.mxu0 0.0
        %1581 = vmatprep.subr.mxu0 0.0
        %1582 = vmatpush1.msra.mxu0 0.0
        %1583 = vmatprep.subr.mxu0 0.0
        %1584 = vmatpush1.msra.mxu0 0.0
        %1585 = vmatprep.subr.mxu0 0.0
        %1586 = vmatpush1.msra.mxu0 0.0
        %1587 = vmatprep.mubr.f32.mxu0 0.0
        %1588 = vmatmul.mubr.f32.gmra.mrb[0].mxu0 %v1476
        %v1589 = vpop.f32.mrb[0].mxu0
        %v1590 = vadd.f32 %v1474, %v1589
        %v1591 = vpop.f32.mrb[0].mxu0
        %1592 = vmatprep.mubr.f32.mxu0 0.0
        %1593 = vmatmul.mubr.f32.gmra.mrb[0].mxu0 %v1479
        %v1594 = vpop.f32.mrb[0].mxu0
        %v1595 = vadd.f32 %v1474, %v1594
        %v1596 = vpop.f32.mrb[0].mxu0
        %1597 = vmatprep.mubr.f32.mxu0 0.0
        %1598 = vmatmul.mubr.f32.gmra.mrb[0].mxu0 %v1482
        %v1599 = vpop.f32.mrb[0].mxu0
        %v1600 = vadd.f32 %v1474, %v1599
        %v1601 = vpop.f32.mrb[0].mxu0
        %1602 = vmatprep.mubr.f32.mxu0 0.0
        %1603 = vmatmul.mubr.f32.gmra.mrb[0].mxu0 %v1485
        %v1604 = vpop.f32.mrb[0].mxu0
        %v1605 = vadd.f32 %v1474, %v1604
        %v1606 = vpop.f32.mrb[0].mxu0
        %1607 = vmatprep.mubr.f32.mxu0 0.0
        %1608 = vmatmul.mubr.f32.gmra.mrb[0].mxu0 %v1488
        %v1609 = vpop.f32.mrb[0].mxu0
        %v1610 = vadd.f32 %v1474, %v1609
        %v1611 = vpop.f32.mrb[0].mxu0
        %1612 = vmatprep.mubr.f32.mxu0 0.0
        %1613 = vmatmul.mubr.f32.gmra.mrb[0].mxu0 %v1491
        %v1614 = vpop.f32.mrb[0].mxu0
        %v1615 = vadd.f32 %v1474, %v1614
        %v1616 = vpop.f32.mrb[0].mxu0
        %1617 = vmatprep.mubr.f32.mxu0 0.0
        %1618 = vmatmul.mubr.f32.gmra.mrb[0].mxu0 %v1494
        %v1619 = vpop.f32.mrb[0].mxu0
        %v1620 = vadd.f32 %v1474, %v1619
        %v1621 = vpop.f32.mrb[0].mxu0
        %1622 = vmatprep.mubr.f32.mxu0 0.0
        %1623 = vmatmul.mubr.f32.gmra.mrb[0].mxu0 %v1497
        %v1624 = vpop.f32.mrb[0].mxu0
        %v1625 = vadd.f32 %v1474, %v1624
        %v1626 = vpop.f32.mrb[0].mxu0
        %1627 = vmatprep.mubr.f32.mxu0 0.0
        %1628 = vmatmul.mubr.f32.gmra.mrb[0].mxu0 %v1500
        %v1629 = vpop.f32.mrb[0].mxu0
        %v1630 = vadd.f32 %v1474, %v1629
        %v1631 = vpop.f32.mrb[0].mxu0
        %1632 = vmatprep.mubr.f32.mxu0 0.0
        %1633 = vmatmul.mubr.f32.gmra.mrb[0].mxu0 %v1503
        %v1634 = vpop.f32.mrb[0].mxu0
        %v1635 = vadd.f32 %v1474, %v1634
        %v1636 = vpop.f32.mrb[0].mxu0
        %1637 = vmatprep.mubr.f32.mxu0 0.0
        %1638 = vmatmul.mubr.f32.gmra.mrb[0].mxu0 %v1506
        %v1639 = vpop.f32.mrb[0].mxu0
        %v1640 = vadd.f32 %v1474, %v1639
        %v1641 = vpop.f32.mrb[0].mxu0
        %1642 = vmatprep.mubr.f32.mxu0 0.0
        %1643 = vmatmul.mubr.f32.gmra.mrb[0].mxu0 %v1509
        %v1644 = vpop.f32.mrb[0].mxu0
        %v1645 = vadd.f32 %v1474, %v1644
        %v1646 = vpop.f32.mrb[0].mxu0
        %1647 = vmatprep.mubr.f32.mxu0 0.0
        %1648 = vmatmul.mubr.f32.gmra.mrb[0].mxu0 %v1512
        %v1649 = vpop.f32.mrb[0].mxu0
        %v1650 = vadd.f32 %v1474, %v1649
        %v1651 = vpop.f32.mrb[0].mxu0
        %1652 = vmatprep.mubr.f32.mxu0 0.0
        %1653 = vmatmul.mubr.f32.gmra.mrb[0].mxu0 %v1515
        %v1654 = vpop.f32.mrb[0].mxu0
        %v1655 = vadd.f32 %v1474, %v1654
        %v1656 = vpop.f32.mrb[0].mxu0
        %1657 = vmatprep.mubr.f32.mxu0 0.0
        %1658 = vmatmul.mubr.f32.gmra.mrb[0].mxu0 %v1518
        %v1659 = vpop.f32.mrb[0].mxu0
        %v1660 = vadd.f32 %v1474, %v1659
        %v1661 = vpop.f32.mrb[0].mxu0
        %1662 = vmatprep.mubr.f32.mxu0 0.0
        %1663 = vmatmul.mubr.f32.gmra.mrb[0].mxu0 %v1521
        %v1664 = vpop.f32.mrb[0].mxu0
        %v1665 = vadd.f32 %v1474, %v1664
        %v1666 = vpop.f32.mrb[0].mxu0
        %1667 = vdwg.mxu0
        %s1668 = scalar_lea.vmem %s7, 1
        %v1669 = vld [vmem:[%s1668] sm:$0x1]
        %v1671 = vlaneseq
        %v1672 = vshrl.u32 %v1671, 7
        %v1673 = vsub.s32 0, %v1672
        %v1674 = vrot.slane %v1669, %v1673
        %v1676 = vadd.f32 %v1590, %v1674
        %v1677 = vadd.f32 %v1595, %v1674
        %v1678 = vadd.f32 %v1600, %v1674
        %v1679 = vadd.f32 %v1605, %v1674
        %v1680 = vadd.f32 %v1610, %v1674
        %v1681 = vadd.f32 %v1615, %v1674
        %v1682 = vadd.f32 %v1620, %v1674
        %v1683 = vadd.f32 %v1625, %v1674
        %v1684 = vadd.f32 %v1630, %v1674
        %v1685 = vadd.f32 %v1635, %v1674
        %v1686 = vadd.f32 %v1640, %v1674
        %v1687 = vadd.f32 %v1645, %v1674
        %v1688 = vadd.f32 %v1650, %v1674
        %v1689 = vadd.f32 %v1655, %v1674
        %v1690 = vadd.f32 %v1660, %v1674
        %v1691 = vadd.f32 %v1665, %v1674
        %v1692 = vsel %vm978, %v1676, -inf
        %v1693 = vsel %vm978, %v1677, -inf
        %v1694 = vsel %vm978, %v1678, -inf
        %v1695 = vsel %vm978, %v1679, -inf
        %v1696 = vsel %vm978, %v1680, -inf
        %v1697 = vmax.f32 %v1692, %v1696
        %v1698 = vsel %vm978, %v1681, -inf
        %v1699 = vmax.f32 %v1693, %v1698
        %v1700 = vsel %vm978, %v1682, -inf
        %v1701 = vmax.f32 %v1694, %v1700
        %v1702 = vsel %vm978, %v1683, -inf
        %v1703 = vmax.f32 %v1695, %v1702
        %v1704 = vsel %vm978, %v1684, -inf
        %v1705 = vmax.f32 %v1697, %v1704
        %v1706 = vsel %vm978, %v1685, -inf
        %v1707 = vmax.f32 %v1699, %v1706
        %v1708 = vsel %vm978, %v1686, -inf
        %v1709 = vmax.f32 %v1701, %v1708
        %v1710 = vsel %vm978, %v1687, -inf
        %v1711 = vmax.f32 %v1703, %v1710
        %v1712 = vsel %vm978, %v1688, -inf
        %v1713 = vmax.f32 %v1705, %v1712
        %v1714 = vsel %vm978, %v1689, -inf
        %v1715 = vmax.f32 %v1707, %v1714
        %v1716 = vsel %vm978, %v1690, -inf
        %v1717 = vmax.f32 %v1709, %v1716
        %v1718 = vsel %vm978, %v1691, -inf
        %v1719 = vmax.f32 %v1711, %v1718
        %v1720 = vmax.f32 %v1713, %v1715
        %v1721 = vmax.f32 %v1717, %v1719
        %v1722 = vmax.f32 %v1720, %v1721
        %v1723 = vrot.slane %v1722, 4
        %v1724 = vmax.f32 %v1722, %v1723
        %v1725 = vrot.slane %v1724, 2
        %v1726 = vmax.f32 %v1724, %v1725
        %v1727 = vrot.slane %v1726, 1
        %v1728 = vmax.f32 %v1726, %v1727
        %v1729 = vmax.f32 %v1676, 0.0
        %v1730 = vmax.f32 %v1677, 0.0
        %v1731 = vmax.f32 %v1678, 0.0
        %v1732 = vmax.f32 %v1679, 0.0
        %v1733 = vmax.f32 %v1680, 0.0
        %v1734 = vmax.f32 %v1681, 0.0
        %v1735 = vmax.f32 %v1682, 0.0
        %v1736 = vmax.f32 %v1683, 0.0
        %v1737 = vmax.f32 %v1684, 0.0
        %v1738 = vmax.f32 %v1685, 0.0
        %v1739 = vmax.f32 %v1686, 0.0
        %v1740 = vmax.f32 %v1687, 0.0
        %v1741 = vmax.f32 %v1688, 0.0
        %v1742 = vmax.f32 %v1689, 0.0
        %v1743 = vmax.f32 %v1690, 0.0
        %v1744 = vmax.f32 %v1691, 0.0
        %v1745 = vmax.f32 %v1728, 0.0
        %s1746 = scalar_lea.vmem %s5, 64
        %v1747 = vld [vmem:[%s1746] sm:$0xff]
        %v1748 = vld [vmem:[%s1746 + $0x8] sm:$0xff]
        %v1749 = vld [vmem:[%s1746 + $0x10] sm:$0xff]
        %v1750 = vld [vmem:[%s1746 + $0x18] sm:$0xff]
        %s1751 = scalar_lea.vmem %s6, 64
        %v1752 = vld [vmem:[%s1751] sm:$0xff]
        %v1753 = vld [vmem:[%s1751 + $0x8] sm:$0xff]
        %v1754 = vld [vmem:[%s1751 + $0x10] sm:$0xff]
        %v1755 = vld [vmem:[%s1751 + $0x18] sm:$0xff]
        %v1757 = vsel %vm978, %v1745, 0
        %1759 = vmatprep.subr.mxu0 0.0
        %1760 = vmatpush1.msra.mxu0 %v1752
        %1761 = vmatprep.subr.mxu0 0.0
        %1762 = vmatpush1.msra.mxu0 %v1753
        %1763 = vmatprep.subr.mxu0 0.0
        %1764 = vmatpush1.msra.mxu0 %v1754
        %1765 = vmatprep.subr.mxu0 0.0
        %1766 = vmatpush1.msra.mxu0 %v1755
        %1767 = vmatprep.subr.mxu0 0.0
        %1768 = vmatpush1.msra.mxu0 0.0
        %1769 = vmatprep.subr.mxu0 0.0
        %1770 = vmatpush1.msra.mxu0 0.0
        %1771 = vmatprep.subr.mxu0 0.0
        %1772 = vmatpush1.msra.mxu0 0.0
        %1773 = vmatprep.subr.mxu0 0.0
        %1774 = vmatpush1.msra.mxu0 0.0
        %1775 = vmatprep.subr.mxu0 0.0
        %1776 = vmatpush1.msra.mxu0 0.0
        %1777 = vmatprep.subr.mxu0 0.0
        %1778 = vmatpush1.msra.mxu0 0.0
        %1779 = vmatprep.subr.mxu0 0.0
        %1780 = vmatpush1.msra.mxu0 0.0
        %1781 = vmatprep.subr.mxu0 0.0
        %1782 = vmatpush1.msra.mxu0 0.0
        %1783 = vmatprep.subr.mxu0 0.0
        %1784 = vmatpush1.msra.mxu0 0.0
        %1785 = vmatprep.subr.mxu0 0.0
        %1786 = vmatpush1.msra.mxu0 0.0
        %1787 = vmatprep.subr.mxu0 0.0
        %1788 = vmatpush1.msra.mxu0 0.0
        %1789 = vmatprep.subr.mxu0 0.0
        %1790 = vmatpush1.msra.mxu0 0.0
        %1791 = vmatprep.subr.mxu0 0.0
        %1792 = vmatpush1.msra.mxu0 0.0
        %1793 = vmatprep.subr.mxu0 0.0
        %1794 = vmatpush1.msra.mxu0 0.0
        %1795 = vmatprep.subr.mxu0 0.0
        %1796 = vmatpush1.msra.mxu0 0.0
        %1797 = vmatprep.subr.mxu0 0.0
        %1798 = vmatpush1.msra.mxu0 0.0
        %1799 = vmatprep.subr.mxu0 0.0
        %1800 = vmatpush1.msra.mxu0 0.0
        %1801 = vmatprep.subr.mxu0 0.0
        %1802 = vmatpush1.msra.mxu0 0.0
        %1803 = vmatprep.subr.mxu0 0.0
        %1804 = vmatpush1.msra.mxu0 0.0
        %1805 = vmatprep.subr.mxu0 0.0
        %1806 = vmatpush1.msra.mxu0 0.0
        %1807 = vmatprep.subr.mxu0 0.0
        %1808 = vmatpush1.msra.mxu0 0.0
        %1809 = vmatprep.subr.mxu0 0.0
        %1810 = vmatpush1.msra.mxu0 0.0
        %1811 = vmatprep.subr.mxu0 0.0
        %1812 = vmatpush1.msra.mxu0 0.0
        %1813 = vmatprep.subr.mxu0 0.0
        %1814 = vmatpush1.msra.mxu0 0.0
        %1815 = vmatprep.subr.mxu0 0.0
        %1816 = vmatpush1.msra.mxu0 0.0
        %1817 = vmatprep.subr.mxu0 0.0
        %1818 = vmatpush1.msra.mxu0 0.0
        %1819 = vmatprep.subr.mxu0 0.0
        %1820 = vmatpush1.msra.mxu0 0.0
        %1821 = vmatprep.subr.mxu0 0.0
        %1822 = vmatpush1.msra.mxu0 0.0
        %1823 = vmatprep.mubr.f32.mxu0 0.0
        %1824 = vmatmul.mubr.f32.gmra.mrb[0].mxu0 %v1757
        %v1825 = vpop.f32.mrb[0].mxu0
        %v1826 = vadd.f32 0.0, %v1825
        %v1827 = vpop.f32.mrb[0].mxu0
        %1828 = vdwg.mxu0
        %v1829 = vlaneseq
        %v1830 = vshrl.u32 %v1829, 7
        %v1831 = vsub.s32 0, %v1830
        %v1832 = vrot.slane %v1826, %v1831
        %v1834 = vsel %vm978, %v1729, 0
        %v1837 = vsel %vm978, %v1730, 0
        %v1840 = vsel %vm978, %v1731, 0
        %v1843 = vsel %vm978, %v1732, 0
        %v1846 = vsel %vm978, %v1733, 0
        %v1849 = vsel %vm978, %v1734, 0
        %v1852 = vsel %vm978, %v1735, 0
        %v1855 = vsel %vm978, %v1736, 0
        %v1858 = vsel %vm978, %v1737, 0
        %v1861 = vsel %vm978, %v1738, 0
        %v1864 = vsel %vm978, %v1739, 0
        %v1867 = vsel %vm978, %v1740, 0
        %v1870 = vsel %vm978, %v1741, 0
        %v1873 = vsel %vm978, %v1742, 0
        %v1876 = vsel %vm978, %v1743, 0
        %v1879 = vsel %vm978, %v1744, 0
        %1881 = vmatprep.subr.mxu0 0.0
        %1882 = vmatpush1.msra.mxu0 %v1747
        %1883 = vmatprep.subr.mxu0 0.0
        %1884 = vmatpush1.msra.mxu0 %v1748
        %1885 = vmatprep.subr.mxu0 0.0
        %1886 = vmatpush1.msra.mxu0 %v1749
        %1887 = vmatprep.subr.mxu0 0.0
        %1888 = vmatpush1.msra.mxu0 %v1750
        %1889 = vmatprep.subr.mxu0 0.0
        %1890 = vmatpush1.msra.mxu0 0.0
        %1891 = vmatprep.subr.mxu0 0.0
        %1892 = vmatpush1.msra.mxu0 0.0
        %1893 = vmatprep.subr.mxu0 0.0
        %1894 = vmatpush1.msra.mxu0 0.0
        %1895 = vmatprep.subr.mxu0 0.0
        %1896 = vmatpush1.msra.mxu0 0.0
        %1897 = vmatprep.subr.mxu0 0.0
        %1898 = vmatpush1.msra.mxu0 0.0
        %1899 = vmatprep.subr.mxu0 0.0
        %1900 = vmatpush1.msra.mxu0 0.0
        %1901 = vmatprep.subr.mxu0 0.0
        %1902 = vmatpush1.msra.mxu0 0.0
        %1903 = vmatprep.subr.mxu0 0.0
        %1904 = vmatpush1.msra.mxu0 0.0
        %1905 = vmatprep.subr.mxu0 0.0
        %1906 = vmatpush1.msra.mxu0 0.0
        %1907 = vmatprep.subr.mxu0 0.0
        %1908 = vmatpush1.msra.mxu0 0.0
        %1909 = vmatprep.subr.mxu0 0.0
        %1910 = vmatpush1.msra.mxu0 0.0
        %1911 = vmatprep.subr.mxu0 0.0
        %1912 = vmatpush1.msra.mxu0 0.0
        %1913 = vmatprep.subr.mxu0 0.0
        %1914 = vmatpush1.msra.mxu0 0.0
        %1915 = vmatprep.subr.mxu0 0.0
        %1916 = vmatpush1.msra.mxu0 0.0
        %1917 = vmatprep.subr.mxu0 0.0
        %1918 = vmatpush1.msra.mxu0 0.0
        %1919 = vmatprep.subr.mxu0 0.0
        %1920 = vmatpush1.msra.mxu0 0.0
        %1921 = vmatprep.subr.mxu0 0.0
        %1922 = vmatpush1.msra.mxu0 0.0
        %1923 = vmatprep.subr.mxu0 0.0
        %1924 = vmatpush1.msra.mxu0 0.0
        %1925 = vmatprep.subr.mxu0 0.0
        %1926 = vmatpush1.msra.mxu0 0.0
        %1927 = vmatprep.subr.mxu0 0.0
        %1928 = vmatpush1.msra.mxu0 0.0
        %1929 = vmatprep.subr.mxu0 0.0
        %1930 = vmatpush1.msra.mxu0 0.0
        %1931 = vmatprep.subr.mxu0 0.0
        %1932 = vmatpush1.msra.mxu0 0.0
        %1933 = vmatprep.subr.mxu0 0.0
        %1934 = vmatpush1.msra.mxu0 0.0
        %1935 = vmatprep.subr.mxu0 0.0
        %1936 = vmatpush1.msra.mxu0 0.0
        %1937 = vmatprep.subr.mxu0 0.0
        %1938 = vmatpush1.msra.mxu0 0.0
        %1939 = vmatprep.subr.mxu0 0.0
        %1940 = vmatpush1.msra.mxu0 0.0
        %1941 = vmatprep.subr.mxu0 0.0
        %1942 = vmatpush1.msra.mxu0 0.0
        %1943 = vmatprep.subr.mxu0 0.0
        %1944 = vmatpush1.msra.mxu0 0.0
        %1945 = vmatprep.mubr.f32.mxu0 0.0
        %1946 = vmatmul.mubr.f32.gmra.mrb[0].mxu0 %v1834
        %v1947 = vpop.f32.mrb[0].mxu0
        %v1948 = vadd.f32 %v1832, %v1947
        %v1949 = vpop.f32.mrb[0].mxu0
        %1950 = vmatprep.mubr.f32.mxu0 0.0
        %1951 = vmatmul.mubr.f32.gmra.mrb[0].mxu0 %v1837
        %v1952 = vpop.f32.mrb[0].mxu0
        %v1953 = vadd.f32 %v1832, %v1952
        %v1954 = vpop.f32.mrb[0].mxu0
        %1955 = vmatprep.mubr.f32.mxu0 0.0
        %1956 = vmatmul.mubr.f32.gmra.mrb[0].mxu0 %v1840
        %v1957 = vpop.f32.mrb[0].mxu0
        %v1958 = vadd.f32 %v1832, %v1957
        %v1959 = vpop.f32.mrb[0].mxu0
        %1960 = vmatprep.mubr.f32.mxu0 0.0
        %1961 = vmatmul.mubr.f32.gmra.mrb[0].mxu0 %v1843
        %v1962 = vpop.f32.mrb[0].mxu0
        %v1963 = vadd.f32 %v1832, %v1962
        %v1964 = vpop.f32.mrb[0].mxu0
        %1965 = vmatprep.mubr.f32.mxu0 0.0
        %1966 = vmatmul.mubr.f32.gmra.mrb[0].mxu0 %v1846
        %v1967 = vpop.f32.mrb[0].mxu0
        %v1968 = vadd.f32 %v1832, %v1967
        %v1969 = vpop.f32.mrb[0].mxu0
        %1970 = vmatprep.mubr.f32.mxu0 0.0
        %1971 = vmatmul.mubr.f32.gmra.mrb[0].mxu0 %v1849
        %v1972 = vpop.f32.mrb[0].mxu0
        %v1973 = vadd.f32 %v1832, %v1972
        %v1974 = vpop.f32.mrb[0].mxu0
        %1975 = vmatprep.mubr.f32.mxu0 0.0
        %1976 = vmatmul.mubr.f32.gmra.mrb[0].mxu0 %v1852
        %v1977 = vpop.f32.mrb[0].mxu0
        %v1978 = vadd.f32 %v1832, %v1977
        %v1979 = vpop.f32.mrb[0].mxu0
        %1980 = vmatprep.mubr.f32.mxu0 0.0
        %1981 = vmatmul.mubr.f32.gmra.mrb[0].mxu0 %v1855
        %v1982 = vpop.f32.mrb[0].mxu0
        %v1983 = vadd.f32 %v1832, %v1982
        %v1984 = vpop.f32.mrb[0].mxu0
        %1985 = vmatprep.mubr.f32.mxu0 0.0
        %1986 = vmatmul.mubr.f32.gmra.mrb[0].mxu0 %v1858
        %v1987 = vpop.f32.mrb[0].mxu0
        %v1988 = vadd.f32 %v1832, %v1987
        %v1989 = vpop.f32.mrb[0].mxu0
        %1990 = vmatprep.mubr.f32.mxu0 0.0
        %1991 = vmatmul.mubr.f32.gmra.mrb[0].mxu0 %v1861
        %v1992 = vpop.f32.mrb[0].mxu0
        %v1993 = vadd.f32 %v1832, %v1992
        %v1994 = vpop.f32.mrb[0].mxu0
        %1995 = vmatprep.mubr.f32.mxu0 0.0
        %1996 = vmatmul.mubr.f32.gmra.mrb[0].mxu0 %v1864
        %v1997 = vpop.f32.mrb[0].mxu0
        %v1998 = vadd.f32 %v1832, %v1997
        %v1999 = vpop.f32.mrb[0].mxu0
        %2000 = vmatprep.mubr.f32.mxu0 0.0
        %2001 = vmatmul.mubr.f32.gmra.mrb[0].mxu0 %v1867
        %v2002 = vpop.f32.mrb[0].mxu0
        %v2003 = vadd.f32 %v1832, %v2002
        %v2004 = vpop.f32.mrb[0].mxu0
        %2005 = vmatprep.mubr.f32.mxu0 0.0
        %2006 = vmatmul.mubr.f32.gmra.mrb[0].mxu0 %v1870
        %v2007 = vpop.f32.mrb[0].mxu0
        %v2008 = vadd.f32 %v1832, %v2007
        %v2009 = vpop.f32.mrb[0].mxu0
        %2010 = vmatprep.mubr.f32.mxu0 0.0
        %2011 = vmatmul.mubr.f32.gmra.mrb[0].mxu0 %v1873
        %v2012 = vpop.f32.mrb[0].mxu0
        %v2013 = vadd.f32 %v1832, %v2012
        %v2014 = vpop.f32.mrb[0].mxu0
        %2015 = vmatprep.mubr.f32.mxu0 0.0
        %2016 = vmatmul.mubr.f32.gmra.mrb[0].mxu0 %v1876
        %v2017 = vpop.f32.mrb[0].mxu0
        %v2018 = vadd.f32 %v1832, %v2017
        %v2019 = vpop.f32.mrb[0].mxu0
        %2020 = vmatprep.mubr.f32.mxu0 0.0
        %2021 = vmatmul.mubr.f32.gmra.mrb[0].mxu0 %v1879
        %v2022 = vpop.f32.mrb[0].mxu0
        %v2023 = vadd.f32 %v1832, %v2022
        %v2024 = vpop.f32.mrb[0].mxu0
        %2025 = vdwg.mxu0
        %s2026 = scalar_lea.vmem %s7, 2
        %v2027 = vld [vmem:[%s2026] sm:$0x1]
        %v2029 = vlaneseq
        %v2030 = vshrl.u32 %v2029, 7
        %v2031 = vsub.s32 0, %v2030
        %v2032 = vrot.slane %v2027, %v2031
        %v2034 = vadd.f32 %v1948, %v2032
        %v2035 = vadd.f32 %v1953, %v2032
        %v2036 = vadd.f32 %v1958, %v2032
        %v2037 = vadd.f32 %v1963, %v2032
        %v2038 = vadd.f32 %v1968, %v2032
        %v2039 = vadd.f32 %v1973, %v2032
        %v2040 = vadd.f32 %v1978, %v2032
        %v2041 = vadd.f32 %v1983, %v2032
        %v2042 = vadd.f32 %v1988, %v2032
        %v2043 = vadd.f32 %v1993, %v2032
        %v2044 = vadd.f32 %v1998, %v2032
        %v2045 = vadd.f32 %v2003, %v2032
        %v2046 = vadd.f32 %v2008, %v2032
        %v2047 = vadd.f32 %v2013, %v2032
        %v2048 = vadd.f32 %v2018, %v2032
        %v2049 = vadd.f32 %v2023, %v2032
        %v2050 = vsel %vm978, %v2034, -inf
        %v2051 = vsel %vm978, %v2035, -inf
        %v2052 = vsel %vm978, %v2036, -inf
        %v2053 = vsel %vm978, %v2037, -inf
        %v2054 = vsel %vm978, %v2038, -inf
        %v2055 = vmax.f32 %v2050, %v2054
        %v2056 = vsel %vm978, %v2039, -inf
        %v2057 = vmax.f32 %v2051, %v2056
        %v2058 = vsel %vm978, %v2040, -inf
        %v2059 = vmax.f32 %v2052, %v2058
        %v2060 = vsel %vm978, %v2041, -inf
        %v2061 = vmax.f32 %v2053, %v2060
        %v2062 = vsel %vm978, %v2042, -inf
        %v2063 = vmax.f32 %v2055, %v2062
        %v2064 = vsel %vm978, %v2043, -inf
        %v2065 = vmax.f32 %v2057, %v2064
        %v2066 = vsel %vm978, %v2044, -inf
        %v2067 = vmax.f32 %v2059, %v2066
        %v2068 = vsel %vm978, %v2045, -inf
        %v2069 = vmax.f32 %v2061, %v2068
        %v2070 = vsel %vm978, %v2046, -inf
        %v2071 = vmax.f32 %v2063, %v2070
        %v2072 = vsel %vm978, %v2047, -inf
        %v2073 = vmax.f32 %v2065, %v2072
        %v2074 = vsel %vm978, %v2048, -inf
        %v2075 = vmax.f32 %v2067, %v2074
        %v2076 = vsel %vm978, %v2049, -inf
        %v2077 = vmax.f32 %v2069, %v2076
        %v2078 = vmax.f32 %v2071, %v2073
        %v2079 = vmax.f32 %v2075, %v2077
        %v2080 = vmax.f32 %v2078, %v2079
        %v2081 = vrot.slane %v2080, 4
        %v2082 = vmax.f32 %v2080, %v2081
        %v2083 = vrot.slane %v2082, 2
        %v2084 = vmax.f32 %v2082, %v2083
        %v2085 = vrot.slane %v2084, 1
        %v2086 = vmax.f32 %v2084, %v2085
        %v2087 = vmax.f32 %v2086, 0.0
        %v2088 = vld [vmem:[%s8] sm:$0xff]
        %v2089 = vld [vmem:[%s8 + $0x8] sm:$0xff]
        %v2090 = vld [vmem:[%s8 + $0x10] sm:$0xff]
        %v2091 = vld [vmem:[%s8 + $0x18] sm:$0xff]
        %v2092 = vld [vmem:[%s9] sm:$0x1]
        %v2094 = vsel %vm978, %v2087, 0
        %2096 = vmatprep.subr.mxu0 0.0
        %2097 = vmatpush1.msra.mxu0 %v2088
        %2098 = vmatprep.subr.mxu0 0.0
        %2099 = vmatpush1.msra.mxu0 %v2089
        %2100 = vmatprep.subr.mxu0 0.0
        %2101 = vmatpush1.msra.mxu0 %v2090
        %2102 = vmatprep.subr.mxu0 0.0
        %2103 = vmatpush1.msra.mxu0 %v2091
        %2104 = vmatprep.subr.mxu0 0.0
        %2105 = vmatpush1.msra.mxu0 0.0
        %2106 = vmatprep.subr.mxu0 0.0
        %2107 = vmatpush1.msra.mxu0 0.0
        %2108 = vmatprep.subr.mxu0 0.0
        %2109 = vmatpush1.msra.mxu0 0.0
        %2110 = vmatprep.subr.mxu0 0.0
        %2111 = vmatpush1.msra.mxu0 0.0
        %2112 = vmatprep.subr.mxu0 0.0
        %2113 = vmatpush1.msra.mxu0 0.0
        %2114 = vmatprep.subr.mxu0 0.0
        %2115 = vmatpush1.msra.mxu0 0.0
        %2116 = vmatprep.subr.mxu0 0.0
        %2117 = vmatpush1.msra.mxu0 0.0
        %2118 = vmatprep.subr.mxu0 0.0
        %2119 = vmatpush1.msra.mxu0 0.0
        %2120 = vmatprep.subr.mxu0 0.0
        %2121 = vmatpush1.msra.mxu0 0.0
        %2122 = vmatprep.subr.mxu0 0.0
        %2123 = vmatpush1.msra.mxu0 0.0
        %2124 = vmatprep.subr.mxu0 0.0
        %2125 = vmatpush1.msra.mxu0 0.0
        %2126 = vmatprep.subr.mxu0 0.0
        %2127 = vmatpush1.msra.mxu0 0.0
        %2128 = vmatprep.subr.mxu0 0.0
        %2129 = vmatpush1.msra.mxu0 0.0
        %2130 = vmatprep.subr.mxu0 0.0
        %2131 = vmatpush1.msra.mxu0 0.0
        %2132 = vmatprep.subr.mxu0 0.0
        %2133 = vmatpush1.msra.mxu0 0.0
        %2134 = vmatprep.subr.mxu0 0.0
        %2135 = vmatpush1.msra.mxu0 0.0
        %2136 = vmatprep.subr.mxu0 0.0
        %2137 = vmatpush1.msra.mxu0 0.0
        %2138 = vmatprep.subr.mxu0 0.0
        %2139 = vmatpush1.msra.mxu0 0.0
        %2140 = vmatprep.subr.mxu0 0.0
        %2141 = vmatpush1.msra.mxu0 0.0
        %2142 = vmatprep.subr.mxu0 0.0
        %2143 = vmatpush1.msra.mxu0 0.0
        %2144 = vmatprep.subr.mxu0 0.0
        %2145 = vmatpush1.msra.mxu0 0.0
        %2146 = vmatprep.subr.mxu0 0.0
        %2147 = vmatpush1.msra.mxu0 0.0
        %2148 = vmatprep.subr.mxu0 0.0
        %2149 = vmatpush1.msra.mxu0 0.0
        %2150 = vmatprep.subr.mxu0 0.0
        %2151 = vmatpush1.msra.mxu0 0.0
        %2152 = vmatprep.subr.mxu0 0.0
        %2153 = vmatpush1.msra.mxu0 0.0
        %2154 = vmatprep.subr.mxu0 0.0
        %2155 = vmatpush1.msra.mxu0 0.0
        %2156 = vmatprep.subr.mxu0 0.0
        %2157 = vmatpush1.msra.mxu0 0.0
        %2158 = vmatprep.subr.mxu0 0.0
        %2159 = vmatpush1.msra.mxu0 0.0
        %2160 = vmatprep.mubr.f32.mxu0 0.0
        %2161 = vmatmul.mubr.f32.gmra.mrb[0].mxu0 %v2094
        %v2162 = vpop.f32.mrb[0].mxu0
        %v2163 = vadd.f32 %v2092, %v2162
        %v2164 = vpop.f32.mrb[0].mxu0
        %2165 = vdwg.mxu0
        %v2166 = vld [vmem:[%s10] sm:$0xff]
        %v2167 = vld [vmem:[%s10 + $0x8] sm:$0xff]
        %v2168 = vld [vmem:[%s10 + $0x10] sm:$0xff]
        %v2169 = vld [vmem:[%s10 + $0x18] sm:$0xff]
        %v2170 = vld [vmem:[%s11] sm:$0x1]
        %v2172 = vsel %vm978, %v2163, 0
        %2174 = vmatprep.subr.mxu0 0.0
        %2175 = vmatpush1.msra.mxu0 %v2166
        %2176 = vmatprep.subr.mxu0 0.0
        %2177 = vmatpush1.msra.mxu0 %v2167
        %2178 = vmatprep.subr.mxu0 0.0
        %2179 = vmatpush1.msra.mxu0 %v2168
        %2180 = vmatprep.subr.mxu0 0.0
        %2181 = vmatpush1.msra.mxu0 %v2169
        %2182 = vmatprep.subr.mxu0 0.0
        %2183 = vmatpush1.msra.mxu0 0.0
        %2184 = vmatprep.subr.mxu0 0.0
        %2185 = vmatpush1.msra.mxu0 0.0
        %2186 = vmatprep.subr.mxu0 0.0
        %2187 = vmatpush1.msra.mxu0 0.0
        %2188 = vmatprep.subr.mxu0 0.0
        %2189 = vmatpush1.msra.mxu0 0.0
        %2190 = vmatprep.subr.mxu0 0.0
        %2191 = vmatpush1.msra.mxu0 0.0
        %2192 = vmatprep.subr.mxu0 0.0
        %2193 = vmatpush1.msra.mxu0 0.0
        %2194 = vmatprep.subr.mxu0 0.0
        %2195 = vmatpush1.msra.mxu0 0.0
        %2196 = vmatprep.subr.mxu0 0.0
        %2197 = vmatpush1.msra.mxu0 0.0
        %2198 = vmatprep.subr.mxu0 0.0
        %2199 = vmatpush1.msra.mxu0 0.0
        %2200 = vmatprep.subr.mxu0 0.0
        %2201 = vmatpush1.msra.mxu0 0.0
        %2202 = vmatprep.subr.mxu0 0.0
        %2203 = vmatpush1.msra.mxu0 0.0
        %2204 = vmatprep.subr.mxu0 0.0
        %2205 = vmatpush1.msra.mxu0 0.0
        %2206 = vmatprep.subr.mxu0 0.0
        %2207 = vmatpush1.msra.mxu0 0.0
        %2208 = vmatprep.subr.mxu0 0.0
        %2209 = vmatpush1.msra.mxu0 0.0
        %2210 = vmatprep.subr.mxu0 0.0
        %2211 = vmatpush1.msra.mxu0 0.0
        %2212 = vmatprep.subr.mxu0 0.0
        %2213 = vmatpush1.msra.mxu0 0.0
        %2214 = vmatprep.subr.mxu0 0.0
        %2215 = vmatpush1.msra.mxu0 0.0
        %2216 = vmatprep.subr.mxu0 0.0
        %2217 = vmatpush1.msra.mxu0 0.0
        %2218 = vmatprep.subr.mxu0 0.0
        %2219 = vmatpush1.msra.mxu0 0.0
        %2220 = vmatprep.subr.mxu0 0.0
        %2221 = vmatpush1.msra.mxu0 0.0
        %2222 = vmatprep.subr.mxu0 0.0
        %2223 = vmatpush1.msra.mxu0 0.0
        %2224 = vmatprep.subr.mxu0 0.0
        %2225 = vmatpush1.msra.mxu0 0.0
        %2226 = vmatprep.subr.mxu0 0.0
        %2227 = vmatpush1.msra.mxu0 0.0
        %2228 = vmatprep.subr.mxu0 0.0
        %2229 = vmatpush1.msra.mxu0 0.0
        %2230 = vmatprep.subr.mxu0 0.0
        %2231 = vmatpush1.msra.mxu0 0.0
        %2232 = vmatprep.subr.mxu0 0.0
        %2233 = vmatpush1.msra.mxu0 0.0
        %2234 = vmatprep.subr.mxu0 0.0
        %2235 = vmatpush1.msra.mxu0 0.0
        %2236 = vmatprep.subr.mxu0 0.0
        %2237 = vmatpush1.msra.mxu0 0.0
        %2238 = vmatprep.mubr.f32.mxu0 0.0
        %2239 = vmatmul.mubr.f32.gmra.mrb[0].mxu0 %v2172
        %v2240 = vpop.f32.mrb[0].mxu0
        %v2241 = vadd.f32 %v2170, %v2240
        %v2242 = vpop.f32.mrb[0].mxu0
        %2243 = vdwg.mxu0
        %vm2244 = vcmask 253952
        %2245 = vst.msk [vmem:[%s405] sm:$0x1] %vm2244, %v2241
        %s2246 = sand.u32 %s291, 1
        %s2247 = scalar_lea.sflag [#allocation3], %s2246
        %s2248 = sand.u32 %s291, 1
        %s2249 = scalar_lea.vmem [#allocation2], %s2248
        // Predicated region
        $region69: #{tpu_custom_call.1} parent=67 // pred_check
          %p2250 = pneg %p301
        $region70: #{tpu_custom_call.1} parent=67 // pred_check_branch
          %2252 = sbr.rel (%p2250) target = $region72
        $region71: #{tpu_custom_call.1} parent=67 // pred_region
          %s2254 = ssub.s32 16, 16
          %2255 = vsyncadd %s2247, %s2254
          %s2256 = smul.addr %s26, 16
          %s2257 = scalar_lea.hbm %s12, %s2256
          %s2259 = sshll.u32 %s2249, 4
          %s2260 = int_to_ptr.vmem [resolvable:$true] %s2259
          %2262 = dma.vmem_to_hbm [thread:$0]  %s2260, 16, %s2257, %s2247
        $region72: #{tpu_custom_call.1} parent=67 // pred_fallthru
          _
      $region68: #{tpu_custom_call.1} parent=5 // pred_fallthru
        _
      %p2263 = scmp.le.s32.totalorder 2, %s21
      // Predicated region
      $region73: #{tpu_custom_call.1} parent=5 // pred_check
        %p2264 = pneg %p2263
      $region74: #{tpu_custom_call.1} parent=5 // pred_check_branch
        %2266 = sbr.rel (%p2264) target = $region76
      $region75: #{tpu_custom_call.1} parent=5 // pred_region
        %s2267 = ssub.s32 %s21, 2
        // Predicated region
        $region77: #{tpu_custom_call.1} parent=75 // pred_check
          %p2268 = pneg %p307
        $region78: #{tpu_custom_call.1} parent=75 // pred_check_branch
          %2270 = sbr.rel (%p2268) target = $region80
        $region79: #{tpu_custom_call.1} parent=75 // pred_region
          %s2271 = sand.u32 %s292, 1
          %s2272 = scalar_lea.sflag [#allocation3], %s2271
          %s2273 = sand.u32 %s292, 1
          %s2274 = scalar_lea.vmem [#allocation2], %s2273
          %2275 = dma.done %s2272, 16
        $region80: #{tpu_custom_call.1} parent=75 // pred_fallthru
          _
      $region76: #{tpu_custom_call.1} parent=5 // pred_fallthru
        _
    $region6: #{tpu_custom_call.1} parent=1 // loop_footer
      %s25 = sadd.s32 1, %s21
    $region7: #{tpu_custom_call.1} parent=1 // loop_footer_branch
      %20 = sbr.rel target = $region3
    $region8: #{tpu_custom_call.1} parent=1 // loop_exit
      _
    %2276 = vsyncpa [#allocation3], 1
    %s2277 = scalar_lea.sflag [#allocation3], 1
    %2278 = vsyncpa %s2277, 1

</llo_original>
